<compile_context>
chip_gen: v5e
topology: v5e:2x2
jax: 0.10.0
libtpu: 0.0.40
codegen_flags: <defaults>
</compile_context>

<pallas_src>
import functools

import jax
import jax.numpy as jnp
from jax.experimental import pallas as pl
from jax.experimental.pallas import tpu as pltpu


def _ceil_to(x, m):
    return (x + m - 1) // m * m


def _tiles(n, block_rows):
    """Pick (query tile, padded N): tiles are multiples of 128, grid >= 2 steps."""
    n_pad0 = _ceil_to(max(int(n), 1), 128)
    cap = max(128, _ceil_to(int(block_rows), 128)) if block_rows else 256
    steps = max(2, -(-n_pad0 // cap))            # >= 2 steps: keep both v7x TCs busy
    tm = min(cap, _ceil_to(-(-n_pad0 // steps), 128))
    steps = max(2, -(-n_pad0 // tm))
    return tm, steps * tm


def _triplet_adp_kernel(xk_ref, xqt_ref, tk_ref, tq_ref, sqk_ref, sqq_ref,
                        vk_ref, loss_ref, corr_ref, *, alpha, gamma, square):
    # One MXU matmul per grid step: (Np, Dp) @ (Dp, TM) -> (Np, TM), f32 acc.
    gram = jnp.dot(xk_ref[...], xqt_ref[...],
                   preferred_element_type=jnp.float32)

    sq_k = sqk_ref[...]                                  # (Np, 1)  ||key||^2
    sq_q = sqq_ref[...]                                  # (1, TM)  ||query||^2
    dist = jnp.sqrt(jnp.maximum(sq_k + sq_q - 2.0 * gram, 1e-12))   # (Np, TM)

    v_k = vk_ref[...]                                    # (Np, 1) key validity {0,1}
    same = (tk_ref[...] == tq_ref[...]).astype(jnp.float32)         # (Np, TM)
    is_pos = same * v_k                                  # padded keys masked out
    is_neg = v_k - is_pos                                # == (1 - same) * v_k

    if alpha == 1.0:
        da = dist
    else:
        da = dist * jnp.float32(alpha)

    # --- positives: softmax over the masked logits alpha*dist*is_pos (as in the
    # PyTorch reference); normalization folded into the reductions.
    lp = da * is_pos
    mx_p = jnp.max(lp, axis=0, keepdims=True)            # (1, TM), >= 0
    e_p = jnp.exp(lp - mx_p) * is_pos
    num_p = jnp.sum(dist * e_p, axis=0, keepdims=True)
    den_p = jnp.sum(e_p, axis=0, keepdims=True) + 1e-6
    furthest_positive = num_p * pl.reciprocal(den_p, approx=True)

    # --- negatives: logits -alpha*dist*is_neg are <= 0 with exact zeros at the
    # masked entries, so the reference running max is identically 0 -> skip it.
    if alpha >= 0.0:
        e_n = jnp.exp(-da) * is_neg                      # exp(-da) <= 1, no overflow
    else:  # generality fallback if a negative alpha is ever used
        ln_ = -da * is_neg
        e_n = jnp.exp(ln_ - jnp.max(ln_, axis=0, keepdims=True)) * is_neg
    num_n = jnp.sum(dist * e_n, axis=0, keepdims=True)
    den_n = jnp.sum(e_n, axis=0, keepdims=True) + 1e-6
    closest_negative = num_n * pl.reciprocal(den_n, approx=True)

    g = jnp.float32(gamma)
    if square == 0:
        z = g * (closest_negative - furthest_positive)
    else:
        diff_pow = jnp.minimum(
            (furthest_positive - closest_negative) ** 2 * g, 10.0)
        y = jnp.where(furthest_positive > closest_negative, -1.0, 1.0)
        z = y * diff_pow

    # SoftMarginLoss(z, target=1) per element: stable softplus(-z).
    loss_ref[...] = jnp.maximum(-z, 0.0) + jnp.log1p(jnp.exp(-jnp.abs(z)))
    corr_ref[...] = (closest_negative >= furthest_positive).astype(jnp.float32)


@functools.partial(jax.jit, static_argnames=(
    "normalize_feature", "alpha", "gamma", "square", "gram_dtype", "block_rows"))
def triplet_loss_adp(inputs, targets, normalize_feature=False, alpha=1.0,
                     gamma=1.0, square=0, gram_dtype=jnp.float32,
                     block_rows=None):
    """Returns (loss, correct) matching TripletLoss_ADP.forward semantics."""
    n, d = inputs.shape
    x = inputs.astype(jnp.float32)
    if normalize_feature:
        # Same epsilon placement as the PyTorch normalize().
        x = x / (jnp.linalg.norm(x, axis=-1, keepdims=True) + 1e-12)

    sq = jnp.sum(x * x, axis=1)                          # f32 squared norms, once

    tm, n_pad = _tiles(n, block_rows)
    d_pad = _ceil_to(d, 128)
    grid = n_pad // tm

    x_pad = jnp.zeros((n_pad, d_pad), jnp.float32).at[:n, :d].set(x)
    x_pad = x_pad.astype(gram_dtype)
    x_t = x_pad.T                                        # one-time XLA transpose
    sq_pad = jnp.zeros((n_pad,), jnp.float32).at[:n].set(sq)
    t_pad = jnp.full((n_pad,), -1, jnp.int32).at[:n].set(targets.astype(jnp.int32))
    v_keys = (jnp.arange(n_pad) < n).astype(jnp.float32).reshape(n_pad, 1)

    t_col, t_row = t_pad.reshape(n_pad, 1), t_pad.reshape(1, n_pad)
    sq_col, sq_row = sq_pad.reshape(n_pad, 1), sq_pad.reshape(1, n_pad)

    # VMEM budget from actual footprint (double-buffered resident keys +
    # streamed query block + lane-padded key vectors + live f32 temporaries).
    esz = jnp.dtype(gram_dtype).itemsize
    vmem_need = (2 * n_pad * d_pad * esz                 # resident key matrix
                 + 2 * d_pad * tm * esz                  # streamed query block
                 + 6 * n_pad * 128 * 4                   # (Np,1) vectors (lane pad)
                 + 8 * n_pad * tm * 4                    # live (Np,TM) temporaries
                 + 2 * (1 << 20))                        # slack
    vmem_limit = int(min(max(vmem_need, 32 << 20), 100 << 20))

    kernel = functools.partial(_triplet_adp_kernel, alpha=float(alpha),
                               gamma=float(gamma), square=int(square))

    loss_rows, corr_rows = pl.pallas_call(
        kernel,
        out_shape=(jax.ShapeDtypeStruct((1, n_pad), jnp.float32),
                   jax.ShapeDtypeStruct((1, n_pad), jnp.float32)),
        grid=(grid,),
        in_specs=[
            pl.BlockSpec((n_pad, d_pad), lambda i: (0, 0)),  # keys (resident)
            pl.BlockSpec((d_pad, tm), lambda i: (0, i)),     # query block (pre-T)
            pl.BlockSpec((n_pad, 1), lambda i: (0, 0)),      # key labels
            pl.BlockSpec((1, tm), lambda i: (0, i)),         # query labels
            pl.BlockSpec((n_pad, 1), lambda i: (0, 0)),      # ||key||^2
            pl.BlockSpec((1, tm), lambda i: (0, i)),         # ||query||^2
            pl.BlockSpec((n_pad, 1), lambda i: (0, 0)),      # key validity
        ],
        out_specs=(pl.BlockSpec((1, tm), lambda i: (0, i)),  # lane-dense rows
                   pl.BlockSpec((1, tm), lambda i: (0, i))),
        compiler_params=pltpu.CompilerParams(
            dimension_semantics=("parallel",),
            vmem_limit_bytes=vmem_limit),
    )(x_pad, x_t, t_col, t_row, sq_col, sq_row, v_keys)

    # Padded query columns hold finite garbage; simply slice them away.
    loss = jnp.sum(loss_rows[0, :n]) / jnp.float32(n)
    correct = jnp.sum(corr_rows[0, :n]).astype(jnp.int32)
    return loss, correct


def _reference(inputs, targets, normalize_feature=False, alpha=1.0, gamma=1.0,
               square=0, gram_dtype=jnp.float32):
    """Pure-JAX reference of the PyTorch forward (Gram dtype selectable)."""
    x = inputs.astype(jnp.float32)
    if normalize_feature:
        x = x / (jnp.linalg.norm(x, axis=-1, keepdims=True) + 1e-12)
    sq = jnp.sum(x * x, axis=1, keepdims=True)
    xg = x.astype(gram_dtype)
    gram = jnp.dot(xg, xg.T, preferred_element_type=jnp.float32)
    dist = jnp.sqrt(jnp.clip(sq + sq.T - 2.0 * gram, 1e-12))
    is_pos = (targets[:, None] == targets[None, :]).astype(jnp.float32)
    is_neg = 1.0 - is_pos
    dist_ap = dist * is_pos
    dist_an = dist * is_neg

    def sw(dd, mask):
        mv = jnp.max(dd * mask, axis=1, keepdims=True)
        diff = dd - mv
        z = jnp.sum(jnp.exp(diff) * mask, axis=1, keepdims=True) + 1e-6
        return jnp.exp(diff) * mask / z

    fp = jnp.sum(dist_ap * sw(dist_ap * alpha, is_pos), axis=1)
    cn = jnp.sum(dist_an * sw(-dist_an * alpha, is_neg), axis=1)
    if square == 0:
        loss = jnp.mean(jax.nn.softplus(-gamma * (cn - fp)))
    else:
        diff_pow = jnp.minimum((fp - cn) ** 2 * gamma, 10.0)
        y = jnp.where(fp > cn, -1.0, 1.0)
        loss = jnp.mean(jax.nn.softplus(-y * diff_pow))
    correct = jnp.sum(cn >= fp)
    return loss, correct


if __name__ == "__main__":
    # TripletLoss_ADP has no learnable parameters — nothing to initialize.
    key = jax.random.PRNGKey(0)
    N, D, NUM_IDS = 8, 32, 4
    targets = jnp.array([0, 0, 1, 1, 2, 2, 3, 3], dtype=jnp.int32)  # 4 ids x 2
    kc, kn = jax.random.split(key)
    centers = jax.random.normal(kc, (NUM_IDS, D), dtype=jnp.float32)
    noise = jax.random.normal(kn, (N, D), dtype=jnp.float32) * 0.5
    inputs = centers[targets] + noise

    for nf, sq_flag in [(False, 0), (True, 0), (False, 1)]:
        loss, correct = triplet_loss_adp(inputs, targets, normalize_feature=nf,
                                         alpha=1.0, gamma=1.0, square=sq_flag)
        loss = jax.block_until_ready(loss)
        correct = jax.block_until_ready(correct)
        ref_loss, ref_correct = _reference(inputs, targets, normalize_feature=nf,
                                           alpha=1.0, gamma=1.0, square=sq_flag,
                                           gram_dtype=jnp.float32)
        assert jnp.allclose(loss, ref_loss, rtol=2e-2, atol=1e-5), \
            (nf, sq_flag, float(loss), float(ref_loss))
        assert int(correct) == int(ref_correct), \
            (nf, sq_flag, int(correct), int(ref_correct))

    # TODO(synk): PyTorch returns `correct` via .item() (host int); here it is a JAX int32 scalar.
    print("KERNEL_OK")
</pallas_src>

<mosaic_0001>
module attributes {stable_mosaic.version = 11 : i64} {
  func.func @_triplet_adp_kernel(%arg0: i32, %arg1: memref<256x128xf32, #tpu.memory_space<vmem>>, %arg2: memref<128x128xf32, #tpu.memory_space<vmem>>, %arg3: memref<256x1xi32, #tpu.memory_space<vmem>>, %arg4: memref<1x128xi32, #tpu.memory_space<vmem>>, %arg5: memref<256x1xf32, #tpu.memory_space<vmem>>, %arg6: memref<1x128xf32, #tpu.memory_space<vmem>>, %arg7: memref<256x1xf32, #tpu.memory_space<vmem>>, %arg8: memref<1x128xf32, #tpu.memory_space<vmem>>, %arg9: memref<1x128xf32, #tpu.memory_space<vmem>>) attributes {dimension_semantics = [#tpu.dimension_semantics<parallel>], iteration_bounds = array<i64: 2>, scalar_prefetch = 0 : i64, scratch_operands = 0 : i64, tpu.core_type = #tpu.core_type<tc>, window_params = [{pipeline_mode = #tpu.pipeline_mode<synchronous>, transform_indices = @transform_0, window_bounds = array<i64: 256, 128>}, {transform_indices = @transform_1, window_bounds = array<i64: 128, 128>}, {pipeline_mode = #tpu.pipeline_mode<synchronous>, transform_indices = @transform_2, window_bounds = array<i64: 256, 1>}, {transform_indices = @transform_3, window_bounds = array<i64: 1, 128>}, {pipeline_mode = #tpu.pipeline_mode<synchronous>, transform_indices = @transform_4, window_bounds = array<i64: 256, 1>}, {transform_indices = @transform_5, window_bounds = array<i64: 1, 128>}, {pipeline_mode = #tpu.pipeline_mode<synchronous>, transform_indices = @transform_6, window_bounds = array<i64: 256, 1>}, {transform_indices = @transform_7, window_bounds = array<i64: 1, 128>}, {transform_indices = @transform_8, window_bounds = array<i64: 1, 128>}]} {
    %c0 = arith.constant 0 : index
    %c0_0 = arith.constant 0 : index
    %0 = vector.load %arg1[%c0, %c0_0] : memref<256x128xf32, #tpu.memory_space<vmem>>, vector<256x128xf32>
    %c0_1 = arith.constant 0 : index
    %c0_2 = arith.constant 0 : index
    %1 = vector.load %arg2[%c0_1, %c0_2] : memref<128x128xf32, #tpu.memory_space<vmem>>, vector<128x128xf32>
    %cst = arith.constant dense<0.000000e+00> : vector<256x128xf32>
    %2 = tpu.matmul %0, %1, %cst {dimension_numbers = #tpu.dot_dimension_numbers<[1], [0], [0], [1], [0, 0, 1, 1], [], []>} : vector<256x128xf32>, vector<128x128xf32>, vector<256x128xf32> -> vector<256x128xf32>
    %c0_3 = arith.constant 0 : index
    %c0_4 = arith.constant 0 : index
    %3 = vector.load %arg5[%c0_3, %c0_4] : memref<256x1xf32, #tpu.memory_space<vmem>>, vector<256x1xf32>
    %c0_5 = arith.constant 0 : index
    %c0_6 = arith.constant 0 : index
    %4 = vector.load %arg6[%c0_5, %c0_6] : memref<1x128xf32, #tpu.memory_space<vmem>>, vector<1x128xf32>
    %5 = vector.broadcast %3 : vector<256x1xf32> to vector<256x128xf32>
    %6 = vector.broadcast %4 : vector<1x128xf32> to vector<256x128xf32>
    %7 = arith.addf %5, %6 : vector<256x128xf32>
    %cst_7 = arith.constant 2.000000e+00 : f32
    %8 = vector.broadcast %cst_7 : f32 to vector<256x128xf32>
    %9 = arith.mulf %8, %2 : vector<256x128xf32>
    %10 = arith.subf %7, %9 : vector<256x128xf32>
    %cst_8 = arith.constant 9.99999996E-13 : f32
    %11 = vector.broadcast %cst_8 : f32 to vector<256x128xf32>
    %12 = arith.maximumf %10, %11 : vector<256x128xf32>
    %13 = math.sqrt %12 : vector<256x128xf32>
    %c0_9 = arith.constant 0 : index
    %c0_10 = arith.constant 0 : index
    %14 = vector.load %arg7[%c0_9, %c0_10] : memref<256x1xf32, #tpu.memory_space<vmem>>, vector<256x1xf32>
    %c0_11 = arith.constant 0 : index
    %c0_12 = arith.constant 0 : index
    %15 = vector.load %arg3[%c0_11, %c0_12] : memref<256x1xi32, #tpu.memory_space<vmem>>, vector<256x1xi32>
    %c0_13 = arith.constant 0 : index
    %c0_14 = arith.constant 0 : index
    %16 = vector.load %arg4[%c0_13, %c0_14] : memref<1x128xi32, #tpu.memory_space<vmem>>, vector<1x128xi32>
    %17 = vector.broadcast %15 : vector<256x1xi32> to vector<256x128xi32>
    %18 = vector.broadcast %16 : vector<1x128xi32> to vector<256x128xi32>
    %19 = arith.cmpi eq, %17, %18 : vector<256x128xi32>
    %20 = arith.extui %19 : vector<256x128xi1> to vector<256x128xi32>
    %21 = arith.sitofp %20 : vector<256x128xi32> to vector<256x128xf32>
    %22 = vector.broadcast %14 : vector<256x1xf32> to vector<256x128xf32>
    %23 = arith.mulf %21, %22 : vector<256x128xf32>
    %24 = vector.broadcast %14 : vector<256x1xf32> to vector<256x128xf32>
    %25 = arith.subf %24, %23 : vector<256x128xf32>
    %26 = arith.mulf %13, %23 : vector<256x128xf32>
    %cst_15 = arith.constant dense<0xFF800000> : vector<128xf32>
    %27 = vector.multi_reduction <maximumf>, %26, %cst_15 [0] : vector<256x128xf32> to vector<128xf32>
    %28 = vector.shape_cast %27 : vector<128xf32> to vector<1x128xf32>
    %29 = vector.broadcast %28 : vector<1x128xf32> to vector<256x128xf32>
    %30 = arith.subf %26, %29 : vector<256x128xf32>
    %31 = math.exp %30 : vector<256x128xf32>
    %32 = arith.mulf %31, %23 : vector<256x128xf32>
    %33 = arith.mulf %13, %32 : vector<256x128xf32>
    %cst_16 = arith.constant dense<0.000000e+00> : vector<128xf32>
    %34 = vector.multi_reduction <add>, %33, %cst_16 [0] : vector<256x128xf32> to vector<128xf32>
    %35 = vector.shape_cast %34 : vector<128xf32> to vector<1x128xf32>
    %cst_17 = arith.constant dense<0.000000e+00> : vector<128xf32>
    %36 = vector.multi_reduction <add>, %32, %cst_17 [0] : vector<256x128xf32> to vector<128xf32>
    %37 = vector.shape_cast %36 : vector<128xf32> to vector<1x128xf32>
    %cst_18 = arith.constant 9.99999997E-7 : f32
    %38 = vector.broadcast %cst_18 : f32 to vector<1x128xf32>
    %39 = arith.addf %37, %38 : vector<1x128xf32>
    %40 = tpu.reciprocal %39 {approx = true} : vector<1x128xf32> -> vector<1x128xf32>
    %41 = arith.mulf %35, %40 : vector<1x128xf32>
    %cst_19 = arith.constant 0.000000e+00 : f32
    %42 = vector.broadcast %cst_19 : f32 to vector<256x128xf32>
    %43 = arith.subf %42, %13 : vector<256x128xf32>
    %44 = math.exp %43 : vector<256x128xf32>
    %45 = arith.mulf %44, %25 : vector<256x128xf32>
    %46 = arith.mulf %13, %45 : vector<256x128xf32>
    %cst_20 = arith.constant dense<0.000000e+00> : vector<128xf32>
    %47 = vector.multi_reduction <add>, %46, %cst_20 [0] : vector<256x128xf32> to vector<128xf32>
    %48 = vector.shape_cast %47 : vector<128xf32> to vector<1x128xf32>
    %cst_21 = arith.constant dense<0.000000e+00> : vector<128xf32>
    %49 = vector.multi_reduction <add>, %45, %cst_21 [0] : vector<256x128xf32> to vector<128xf32>
    %50 = vector.shape_cast %49 : vector<128xf32> to vector<1x128xf32>
    %cst_22 = arith.constant 9.99999997E-7 : f32
    %51 = vector.broadcast %cst_22 : f32 to vector<1x128xf32>
    %52 = arith.addf %50, %51 : vector<1x128xf32>
    %53 = tpu.reciprocal %52 {approx = true} : vector<1x128xf32> -> vector<1x128xf32>
    %54 = arith.mulf %48, %53 : vector<1x128xf32>
    %55 = arith.subf %54, %41 : vector<1x128xf32>
    %cst_23 = arith.constant 1.000000e+00 : f32
    %56 = vector.broadcast %cst_23 : f32 to vector<1x128xf32>
    %57 = arith.mulf %56, %55 : vector<1x128xf32>
    %cst_24 = arith.constant 0.000000e+00 : f32
    %58 = vector.broadcast %cst_24 : f32 to vector<1x128xf32>
    %59 = arith.subf %58, %57 : vector<1x128xf32>
    %cst_25 = arith.constant 0.000000e+00 : f32
    %60 = vector.broadcast %cst_25 : f32 to vector<1x128xf32>
    %61 = arith.maximumf %59, %60 : vector<1x128xf32>
    %62 = math.absf %57 : vector<1x128xf32>
    %cst_26 = arith.constant 0.000000e+00 : f32
    %63 = vector.broadcast %cst_26 : f32 to vector<1x128xf32>
    %64 = arith.subf %63, %62 : vector<1x128xf32>
    %65 = math.exp %64 : vector<1x128xf32>
    %66 = math.log1p %65 : vector<1x128xf32>
    %67 = arith.addf %61, %66 : vector<1x128xf32>
    %c0_27 = arith.constant 0 : index
    %c0_28 = arith.constant 0 : index
    %68 = vector.load %arg8[%c0_27, %c0_28] : memref<1x128xf32, #tpu.memory_space<vmem>>, vector<1x128xf32>
    tpu.vector_store %arg8[%c0_27, %c0_28], %67 {strides = array<i32>} : memref<1x128xf32, #tpu.memory_space<vmem>>, vector<1x128xf32>,
    %69 = arith.cmpf oge, %54, %41 : vector<1x128xf32>
    %70 = arith.extui %69 : vector<1x128xi1> to vector<1x128xi32>
    %71 = arith.sitofp %70 : vector<1x128xi32> to vector<1x128xf32>
    %c0_29 = arith.constant 0 : index
    %c0_30 = arith.constant 0 : index
    %72 = vector.load %arg9[%c0_29, %c0_30] : memref<1x128xf32, #tpu.memory_space<vmem>>, vector<1x128xf32>
    tpu.vector_store %arg9[%c0_29, %c0_30], %71 {strides = array<i32>} : memref<1x128xf32, #tpu.memory_space<vmem>>, vector<1x128xf32>,
    return
  }
  func.func @transform_0(%arg0: i32) -> (i32, i32) {
    %c0_i32 = arith.constant 0 : i32
    %c0_i32_0 = arith.constant 0 : i32
    %c0_i32_1 = arith.constant 0 : i32
    return %c0_i32, %c0_i32_0 : i32, i32
  }
  func.func @transform_1(%arg0: i32) -> (i32, i32) {
    %c0_i32 = arith.constant 0 : i32
    %c0_i32_0 = arith.constant 0 : i32
    return %c0_i32, %arg0 : i32, i32
  }
  func.func @transform_2(%arg0: i32) -> (i32, i32) {
    %c0_i32 = arith.constant 0 : i32
    %c0_i32_0 = arith.constant 0 : i32
    %c0_i32_1 = arith.constant 0 : i32
    return %c0_i32, %c0_i32_0 : i32, i32
  }
  func.func @transform_3(%arg0: i32) -> (i32, i32) {
    %c0_i32 = arith.constant 0 : i32
    %c0_i32_0 = arith.constant 0 : i32
    return %c0_i32, %arg0 : i32, i32
  }
  func.func @transform_4(%arg0: i32) -> (i32, i32) {
    %c0_i32 = arith.constant 0 : i32
    %c0_i32_0 = arith.constant 0 : i32
    %c0_i32_1 = arith.constant 0 : i32
    return %c0_i32, %c0_i32_0 : i32, i32
  }
  func.func @transform_5(%arg0: i32) -> (i32, i32) {
    %c0_i32 = arith.constant 0 : i32
    %c0_i32_0 = arith.constant 0 : i32
    return %c0_i32, %arg0 : i32, i32
  }
  func.func @transform_6(%arg0: i32) -> (i32, i32) {
    %c0_i32 = arith.constant 0 : i32
    %c0_i32_0 = arith.constant 0 : i32
    %c0_i32_1 = arith.constant 0 : i32
    return %c0_i32, %c0_i32_0 : i32, i32
  }
  func.func @transform_7(%arg0: i32) -> (i32, i32) {
    %c0_i32 = arith.constant 0 : i32
    %c0_i32_0 = arith.constant 0 : i32
    return %c0_i32, %arg0 : i32, i32
  }
  func.func @transform_8(%arg0: i32) -> (i32, i32) {
    %c0_i32 = arith.constant 0 : i32
    %c0_i32_0 = arith.constant 0 : i32
    return %c0_i32, %arg0 : i32, i32
  }
}

</mosaic_0001>

<llo_original>
// kernel: triplet_loss_adp.1
$region0: #{triplet_loss_adp.1}
  #allocation0 [shape = 'u32[]', space=smem, size = 0x4, offset = 0x4, fixed_abs, tag = 'smem constant byte address 0x4 - core index']
  #allocation1 [shape = 'u32[72,128]{1,0:T(1,128)}', space=vmem, size = 0x9000, scoped, tag = 'internal scratch']
  %s0 = inlined_call_operand.vmem [shape: f32[256,128], index: 0, kind: input, shape index: {}]
  %s1 = inlined_call_operand.vmem [shape: f32[128,256], index: 1, kind: input, shape index: {}]
  %s2 = inlined_call_operand.vmem [shape: s32[256,1], index: 2, kind: input, shape index: {}]
  %s3 = inlined_call_operand.vmem [shape: s32[1,256], index: 3, kind: input, shape index: {}]
  %s4 = inlined_call_operand.vmem [shape: f32[256,1], index: 4, kind: input, shape index: {}]
  %s5 = inlined_call_operand.vmem [shape: f32[1,256], index: 5, kind: input, shape index: {}]
  %s6 = inlined_call_operand.vmem [shape: f32[256,1], index: 6, kind: input, shape index: {}]
  %s7 = inlined_call_operand.vmem [shape: f32[1,256], index: 7, kind: output, shape index: {0}]
  %s8 = inlined_call_operand.vmem [shape: f32[1,256], index: 8, kind: output, shape index: {1}]
  %9 = xla_tuple %s7, %s8
  %s10 = sld [smem:[#allocation0]]
  $region107: #{triplet_loss_adp.1} parent=0
    _
  %s12 = ssub.s32 1, %s10
  %s13 = scalar_select 0, %s12, %s10
  $region1: #{triplet_loss_adp.1} parent=0
    #allocation2 [shape = 'u8[131072]{0}', space=vmem, size = 0x20000, scoped, tag = 'input window, operand 1']
    loop: start=0, step=1, limit=4
    $region2: #{triplet_loss_adp.1} parent=1 // loop_pre_header
      _
    $region3: #{triplet_loss_adp.1} parent=1 // loop_header
      %s15 = sphi 0, %s19
      %p16 = scmp.ge.s32.totalorder %s15, 4
      %s23 = sphi 0, %s23
      %s25 = sphi 0, %s23
      %s26 = sphi 0, %s25
      %s40 = sphi 0, %s26
      %s46 = sphi 0, %s48
      %s49 = sphi 0, %s46
      %s50 = sphi 0, %s49
      %s66 = sphi 0, %s50
      %s70 = sphi 0, %s70
      %s72 = sphi 0, %s70
      %s73 = sphi 0, %s72
      %s87 = sphi 0, %s73
      %s93 = sphi 0, %s95
      %s96 = sphi 0, %s93
      %s97 = sphi 0, %s96
      %s113 = sphi 0, %s97
      %s117 = sphi 0, %s117
      %s119 = sphi 0, %s117
      %s120 = sphi 0, %s119
      %s134 = sphi 0, %s120
      %s140 = sphi 0, %s142
      %s143 = sphi 0, %s140
      %s144 = sphi 0, %s143
      %s160 = sphi 0, %s144
      %s164 = sphi 0, %s164
      %s166 = sphi 0, %s164
      %s167 = sphi 0, %s166
      %s181 = sphi 0, %s167
      %s187 = sphi 0, %s189
      %s190 = sphi 0, %s187
      %s191 = sphi 0, %s190
      %s207 = sphi 0, %s191
      %s213 = sphi 0, %s215
      %s216 = sphi 0, %s213
      %s217 = sphi 0, %s216
      %s233 = sphi 0, %s217
    $region4: #{triplet_loss_adp.1} parent=1 // loop_header_branch
      %18 = sbr.rel (%p16) target = $region8
    $region5: #{triplet_loss_adp.1} parent=1 // loop_body
      %s20 = ssub.s32 %s15, 1
      %s21 = ssub.s32 %s15, 2
      %s22 = sadd.s32 %s15, 1
      %s24 = sadd.s32 %s23, 1
      %p27 = scmp.eq.s32.totalorder %s15, 1
      %p28 = scmp.ne.s32.totalorder %s23, %s25
      %p29 = scmp.eq.s32.totalorder %s15, 0
      %p30 = por %p28, %p29
      %p31 = scmp.ne.s32.totalorder %s23, %s25
      %p32 = scmp.eq.s32.totalorder %s20, 1
      %p33 = por %p31, %p32
      %p34 = scmp.ne.s32.totalorder %s25, %s26
      %p35 = scmp.eq.s32.totalorder %s20, 0
      %p36 = por %p34, %p35
      %p37 = scmp.ne.s32.totalorder %s25, %s26
      %p38 = scmp.eq.s32.totalorder %s21, 1
      %p39 = por %p37, %p38
      %p41 = scmp.ne.s32.totalorder %s26, %s40
      %p42 = scmp.eq.s32.totalorder %s21, 0
      %p43 = por %p41, %p42
      %s44 = ssub.s32 %s15, %s22
      %p45 = scmp.eq.s32.totalorder %s44, 0
      %s47 = sadd.s32 %s46, 1
      %s48 = scalar_select %p45, %s46, %s47
      %p51 = pneg %p45
      %p52 = scmp.eq.s32.totalorder %s15, 1
      %p53 = por %p51, %p52
      %p54 = scmp.ne.s32.totalorder %s46, %s49
      %p55 = scmp.eq.s32.totalorder %s15, 0
      %p56 = por %p54, %p55
      %p57 = scmp.ne.s32.totalorder %s46, %s49
      %p58 = scmp.eq.s32.totalorder %s20, 1
      %p59 = por %p57, %p58
      %p60 = scmp.ne.s32.totalorder %s49, %s50
      %p61 = scmp.eq.s32.totalorder %s20, 0
      %p62 = por %p60, %p61
      %p63 = scmp.ne.s32.totalorder %s49, %s50
      %p64 = scmp.eq.s32.totalorder %s21, 1
      %p65 = por %p63, %p64
      %p67 = scmp.ne.s32.totalorder %s50, %s66
      %p68 = scmp.eq.s32.totalorder %s21, 0
      %p69 = por %p67, %p68
      %s71 = sadd.s32 %s70, 1
      %p74 = scmp.eq.s32.totalorder %s15, 1
      %p75 = scmp.ne.s32.totalorder %s70, %s72
      %p76 = scmp.eq.s32.totalorder %s15, 0
      %p77 = por %p75, %p76
      %p78 = scmp.ne.s32.totalorder %s70, %s72
      %p79 = scmp.eq.s32.totalorder %s20, 1
      %p80 = por %p78, %p79
      %p81 = scmp.ne.s32.totalorder %s72, %s73
      %p82 = scmp.eq.s32.totalorder %s20, 0
      %p83 = por %p81, %p82
      %p84 = scmp.ne.s32.totalorder %s72, %s73
      %p85 = scmp.eq.s32.totalorder %s21, 1
      %p86 = por %p84, %p85
      %p88 = scmp.ne.s32.totalorder %s73, %s87
      %p89 = scmp.eq.s32.totalorder %s21, 0
      %p90 = por %p88, %p89
      %s91 = ssub.s32 %s15, %s22
      %p92 = scmp.eq.s32.totalorder %s91, 0
      %s94 = sadd.s32 %s93, 1
      %s95 = scalar_select %p92, %s93, %s94
      %p98 = pneg %p92
      %p99 = scmp.eq.s32.totalorder %s15, 1
      %p100 = por %p98, %p99
      %p101 = scmp.ne.s32.totalorder %s93, %s96
      %p102 = scmp.eq.s32.totalorder %s15, 0
      %p103 = por %p101, %p102
      %p104 = scmp.ne.s32.totalorder %s93, %s96
      %p105 = scmp.eq.s32.totalorder %s20, 1
      %p106 = por %p104, %p105
      %p107 = scmp.ne.s32.totalorder %s96, %s97
      %p108 = scmp.eq.s32.totalorder %s20, 0
      %p109 = por %p107, %p108
      %p110 = scmp.ne.s32.totalorder %s96, %s97
      %p111 = scmp.eq.s32.totalorder %s21, 1
      %p112 = por %p110, %p111
      %p114 = scmp.ne.s32.totalorder %s97, %s113
      %p115 = scmp.eq.s32.totalorder %s21, 0
      %p116 = por %p114, %p115
      %s118 = sadd.s32 %s117, 1
      %p121 = scmp.eq.s32.totalorder %s15, 1
      %p122 = scmp.ne.s32.totalorder %s117, %s119
      %p123 = scmp.eq.s32.totalorder %s15, 0
      %p124 = por %p122, %p123
      %p125 = scmp.ne.s32.totalorder %s117, %s119
      %p126 = scmp.eq.s32.totalorder %s20, 1
      %p127 = por %p125, %p126
      %p128 = scmp.ne.s32.totalorder %s119, %s120
      %p129 = scmp.eq.s32.totalorder %s20, 0
      %p130 = por %p128, %p129
      %p131 = scmp.ne.s32.totalorder %s119, %s120
      %p132 = scmp.eq.s32.totalorder %s21, 1
      %p133 = por %p131, %p132
      %p135 = scmp.ne.s32.totalorder %s120, %s134
      %p136 = scmp.eq.s32.totalorder %s21, 0
      %p137 = por %p135, %p136
      %s138 = ssub.s32 %s15, %s22
      %p139 = scmp.eq.s32.totalorder %s138, 0
      %s141 = sadd.s32 %s140, 1
      %s142 = scalar_select %p139, %s140, %s141
      %p145 = pneg %p139
      %p146 = scmp.eq.s32.totalorder %s15, 1
      %p147 = por %p145, %p146
      %p148 = scmp.ne.s32.totalorder %s140, %s143
      %p149 = scmp.eq.s32.totalorder %s15, 0
      %p150 = por %p148, %p149
      %p151 = scmp.ne.s32.totalorder %s140, %s143
      %p152 = scmp.eq.s32.totalorder %s20, 1
      %p153 = por %p151, %p152
      %p154 = scmp.ne.s32.totalorder %s143, %s144
      %p155 = scmp.eq.s32.totalorder %s20, 0
      %p156 = por %p154, %p155
      %p157 = scmp.ne.s32.totalorder %s143, %s144
      %p158 = scmp.eq.s32.totalorder %s21, 1
      %p159 = por %p157, %p158
      %p161 = scmp.ne.s32.totalorder %s144, %s160
      %p162 = scmp.eq.s32.totalorder %s21, 0
      %p163 = por %p161, %p162
      %s165 = sadd.s32 %s164, 1
      %p168 = scmp.eq.s32.totalorder %s15, 1
      %p169 = scmp.ne.s32.totalorder %s164, %s166
      %p170 = scmp.eq.s32.totalorder %s15, 0
      %p171 = por %p169, %p170
      %p172 = scmp.ne.s32.totalorder %s164, %s166
      %p173 = scmp.eq.s32.totalorder %s20, 1
      %p174 = por %p172, %p173
      %p175 = scmp.ne.s32.totalorder %s166, %s167
      %p176 = scmp.eq.s32.totalorder %s20, 0
      %p177 = por %p175, %p176
      %p178 = scmp.ne.s32.totalorder %s166, %s167
      %p179 = scmp.eq.s32.totalorder %s21, 1
      %p180 = por %p178, %p179
      %p182 = scmp.ne.s32.totalorder %s167, %s181
      %p183 = scmp.eq.s32.totalorder %s21, 0
      %p184 = por %p182, %p183
      %s185 = ssub.s32 %s15, %s22
      %p186 = scmp.eq.s32.totalorder %s185, 0
      %s188 = sadd.s32 %s187, 1
      %s189 = scalar_select %p186, %s187, %s188
      %p192 = pneg %p186
      %p193 = scmp.eq.s32.totalorder %s15, 1
      %p194 = por %p192, %p193
      %p195 = scmp.ne.s32.totalorder %s187, %s190
      %p196 = scmp.eq.s32.totalorder %s15, 0
      %p197 = por %p195, %p196
      %p198 = scmp.ne.s32.totalorder %s187, %s190
      %p199 = scmp.eq.s32.totalorder %s20, 1
      %p200 = por %p198, %p199
      %p201 = scmp.ne.s32.totalorder %s190, %s191
      %p202 = scmp.eq.s32.totalorder %s20, 0
      %p203 = por %p201, %p202
      %p204 = scmp.ne.s32.totalorder %s190, %s191
      %p205 = scmp.eq.s32.totalorder %s21, 1
      %p206 = por %p204, %p205
      %p208 = scmp.ne.s32.totalorder %s191, %s207
      %p209 = scmp.eq.s32.totalorder %s21, 0
      %p210 = por %p208, %p209
      %s211 = ssub.s32 %s15, %s22
      %p212 = scmp.eq.s32.totalorder %s211, 0
      %s214 = sadd.s32 %s213, 1
      %s215 = scalar_select %p212, %s213, %s214
      %p218 = pneg %p212
      %p219 = scmp.eq.s32.totalorder %s15, 1
      %p220 = por %p218, %p219
      %p221 = scmp.ne.s32.totalorder %s213, %s216
      %p222 = scmp.eq.s32.totalorder %s15, 0
      %p223 = por %p221, %p222
      %p224 = scmp.ne.s32.totalorder %s213, %s216
      %p225 = scmp.eq.s32.totalorder %s20, 1
      %p226 = por %p224, %p225
      %p227 = scmp.ne.s32.totalorder %s216, %s217
      %p228 = scmp.eq.s32.totalorder %s20, 0
      %p229 = por %p227, %p228
      %p230 = scmp.ne.s32.totalorder %s216, %s217
      %p231 = scmp.eq.s32.totalorder %s21, 1
      %p232 = por %p230, %p231
      %p234 = scmp.ne.s32.totalorder %s217, %s233
      %p235 = scmp.eq.s32.totalorder %s21, 0
      %p236 = por %p234, %p235
      %p237 = scmp.le.s32.totalorder 1, %s15
      %p238 = scmp.lt.s32.totalorder %s15, 3
      %p239 = pnand %p237, %p238
      %p240 = pneg %p239
      // Predicated region
      $region9: #{triplet_loss_adp.1} parent=5 // pred_check
        _
      $region10: #{triplet_loss_adp.1} parent=5 // pred_check_branch
        %242 = sbr.rel (%p239) target = $region12
      $region11: #{triplet_loss_adp.1} parent=5 // pred_region
        %s243 = ssub.s32 %s15, 1
        // Predicated region
        $region13: #{triplet_loss_adp.1} parent=11 // pred_check
          %p244 = pneg %p36
        $region14: #{triplet_loss_adp.1} parent=11 // pred_check_branch
          %246 = sbr.rel (%p244) target = $region16
        $region15: #{triplet_loss_adp.1} parent=11 // pred_region
          _
        $region16: #{triplet_loss_adp.1} parent=11 // pred_fallthru
          _
        // Predicated region
        $region17: #{triplet_loss_adp.1} parent=11 // pred_check
          %p247 = pneg %p83
        $region18: #{triplet_loss_adp.1} parent=11 // pred_check_branch
          %249 = sbr.rel (%p247) target = $region20
        $region19: #{triplet_loss_adp.1} parent=11 // pred_region
          _
        $region20: #{triplet_loss_adp.1} parent=11 // pred_fallthru
          _
        // Predicated region
        $region21: #{triplet_loss_adp.1} parent=11 // pred_check
          %p250 = pneg %p130
        $region22: #{triplet_loss_adp.1} parent=11 // pred_check_branch
          %252 = sbr.rel (%p250) target = $region24
        $region23: #{triplet_loss_adp.1} parent=11 // pred_region
          _
        $region24: #{triplet_loss_adp.1} parent=11 // pred_fallthru
          _
        // Predicated region
        $region25: #{triplet_loss_adp.1} parent=11 // pred_check
          %p253 = pneg %p177
        $region26: #{triplet_loss_adp.1} parent=11 // pred_check_branch
          %255 = sbr.rel (%p253) target = $region28
        $region27: #{triplet_loss_adp.1} parent=11 // pred_region
          _
        $region28: #{triplet_loss_adp.1} parent=11 // pred_fallthru
          _
      $region12: #{triplet_loss_adp.1} parent=5 // pred_fallthru
        _
      %p256 = scmp.lt.s32.totalorder %s15, 2
      // Predicated region
      $region29: #{triplet_loss_adp.1} parent=5 // pred_check
        %p257 = pneg %p256
      $region30: #{triplet_loss_adp.1} parent=5 // pred_check_branch
        %259 = sbr.rel (%p257) target = $region32
      $region31: #{triplet_loss_adp.1} parent=5 // pred_region
        // Predicated region
        $region33: #{triplet_loss_adp.1} parent=31 // pred_check
          %p260 = pneg %p56
        $region34: #{triplet_loss_adp.1} parent=31 // pred_check_branch
          %262 = sbr.rel (%p260) target = $region36
        $region35: #{triplet_loss_adp.1} parent=31 // pred_region
          %s263 = sand.u32 %s46, 1
          %s264 = sand.u32 %s46, 1
          %s265 = smul.addr %s264, 128
          %s266 = scalar_lea.vmem [#allocation2], %s265
          %s267 = smul.addr %s15, 8
          %s268 = scalar_lea.vmem %s1, %s267
          // Predicated region
          $region37: #{triplet_loss_adp.1} parent=35 // pred_check
            _
          $region38: #{triplet_loss_adp.1} parent=35 // pred_check_branch
            %270 = sbr.rel (0) target = $region40
          $region39: #{triplet_loss_adp.1} parent=35 // pred_region
            // Predicated region
            $region41: #{triplet_loss_adp.1} parent=39 // pred_check
              _
            $region42: #{triplet_loss_adp.1} parent=39 // pred_check_branch
              %272 = sbr.rel (0) target = $region44
            $region43: #{triplet_loss_adp.1} parent=39 // pred_region
              // Predicated region
              $region56: #{triplet_loss_adp.1} parent=43 // pred_check
                _
              $region57: #{triplet_loss_adp.1} parent=43 // pred_check_branch
                %318 = sbr.rel (0) target = $region59
              $region58: #{triplet_loss_adp.1} parent=43 // pred_region
                loop: start=0, step=1, limit=1
                $region60: #{triplet_loss_adp.1} parent=58 // loop_pre_header
                  _
                $region61: #{triplet_loss_adp.1} parent=58 // loop_header
                  %s320 = sphi 0, %s324
                  %p321 = scmp.ge.s32.totalorder %s320, 1
                  %s325 = sphi %s268, %s268
                  %s326 = sphi %s266, %s266
                $region62: #{triplet_loss_adp.1} parent=58 // loop_header_branch
                  %323 = sbr.rel (%p321) target = $region66
                $region63: #{triplet_loss_adp.1} parent=58 // loop_body
                  %v327 = vld [vmem:[%s325] sm:$0xff]
                  %328 = vst [vmem:[%s326] sm:$0xff] %v327
                  %v329 = vld [vmem:[%s325 + $0x10] sm:$0xff]
                  %330 = vst [vmem:[%s326 + $0x8] sm:$0xff] %v329
                  %v331 = vld [vmem:[%s325 + $0x20] sm:$0xff]
                  %332 = vst [vmem:[%s326 + $0x10] sm:$0xff] %v331
                  %v333 = vld [vmem:[%s325 + $0x30] sm:$0xff]
                  %334 = vst [vmem:[%s326 + $0x18] sm:$0xff] %v333
                  %v335 = vld [vmem:[%s325 + $0x40] sm:$0xff]
                  %336 = vst [vmem:[%s326 + $0x20] sm:$0xff] %v335
                  %v337 = vld [vmem:[%s325 + $0x50] sm:$0xff]
                  %338 = vst [vmem:[%s326 + $0x28] sm:$0xff] %v337
                  %v339 = vld [vmem:[%s325 + $0x60] sm:$0xff]
                  %340 = vst [vmem:[%s326 + $0x30] sm:$0xff] %v339
                  %v341 = vld [vmem:[%s325 + $0x70] sm:$0xff]
                  %342 = vst [vmem:[%s326 + $0x38] sm:$0xff] %v341
                  %v343 = vld [vmem:[%s325 + $0x80] sm:$0xff]
                  %344 = vst [vmem:[%s326 + $0x40] sm:$0xff] %v343
                  %v345 = vld [vmem:[%s325 + $0x90] sm:$0xff]
                  %346 = vst [vmem:[%s326 + $0x48] sm:$0xff] %v345
                  %v347 = vld [vmem:[%s325 + $0xa0] sm:$0xff]
                  %348 = vst [vmem:[%s326 + $0x50] sm:$0xff] %v347
                  %v349 = vld [vmem:[%s325 + $0xb0] sm:$0xff]
                  %350 = vst [vmem:[%s326 + $0x58] sm:$0xff] %v349
                  %v351 = vld [vmem:[%s325 + $0xc0] sm:$0xff]
                  %352 = vst [vmem:[%s326 + $0x60] sm:$0xff] %v351
                  %v353 = vld [vmem:[%s325 + $0xd0] sm:$0xff]
                  %354 = vst [vmem:[%s326 + $0x68] sm:$0xff] %v353
                  %v355 = vld [vmem:[%s325 + $0xe0] sm:$0xff]
                  %356 = vst [vmem:[%s326 + $0x70] sm:$0xff] %v355
                  %v357 = vld [vmem:[%s325 + $0xf0] sm:$0xff]
                  %358 = vst [vmem:[%s326 + $0x78] sm:$0xff] %v357
                $region64: #{triplet_loss_adp.1} parent=58 // loop_footer
                  %s324 = sadd.s32 1, %s320
                $region65: #{triplet_loss_adp.1} parent=58 // loop_footer_branch
                  %319 = sbr.rel target = $region61
                $region66: #{triplet_loss_adp.1} parent=58 // loop_exit
                  _
              $region59: #{triplet_loss_adp.1} parent=43 // pred_fallthru
                _
              // Predicated region
              $region67: #{triplet_loss_adp.1} parent=43 // pred_check
                _
              $region68: #{triplet_loss_adp.1} parent=43 // pred_check_branch
                %360 = sbr.rel target = $region70
              $region69: #{triplet_loss_adp.1} parent=43 // pred_region
                _
              $region70: #{triplet_loss_adp.1} parent=43 // pred_fallthru
                _
            $region44: #{triplet_loss_adp.1} parent=39 // pred_fallthru
              _
            // Predicated region
            $region45: #{triplet_loss_adp.1} parent=39 // pred_check
              _
            $region46: #{triplet_loss_adp.1} parent=39 // pred_check_branch
              %274 = sbr.rel target = $region48
            $region47: #{triplet_loss_adp.1} parent=39 // pred_region
              %s276 = ssub.s32 256, 1
              loop: start=0, step=1, limit=1
              $region49: #{triplet_loss_adp.1} parent=47 // loop_pre_header
                _
              $region50: #{triplet_loss_adp.1} parent=47 // loop_header
                %s278 = sphi 0, %s282
                %p279 = scmp.ge.s32.totalorder %s278, 1
                %s283 = sphi %s268, %s268
                %s284 = sphi %s266, %s266
              $region51: #{triplet_loss_adp.1} parent=47 // loop_header_branch
                %281 = sbr.rel (%p279) target = $region55
              $region52: #{triplet_loss_adp.1} parent=47 // loop_body
                %v285 = vld [vmem:[%s283] sm:%s276]
                %286 = vst [vmem:[%s284] sm:%s276] %v285
                %v287 = vld [vmem:[%s283 + $0x10] sm:%s276]
                %288 = vst [vmem:[%s284 + $0x8] sm:%s276] %v287
                %v289 = vld [vmem:[%s283 + $0x20] sm:%s276]
                %290 = vst [vmem:[%s284 + $0x10] sm:%s276] %v289
                %v291 = vld [vmem:[%s283 + $0x30] sm:%s276]
                %292 = vst [vmem:[%s284 + $0x18] sm:%s276] %v291
                %v293 = vld [vmem:[%s283 + $0x40] sm:%s276]
                %294 = vst [vmem:[%s284 + $0x20] sm:%s276] %v293
                %v295 = vld [vmem:[%s283 + $0x50] sm:%s276]
                %296 = vst [vmem:[%s284 + $0x28] sm:%s276] %v295
                %v297 = vld [vmem:[%s283 + $0x60] sm:%s276]
                %298 = vst [vmem:[%s284 + $0x30] sm:%s276] %v297
                %v299 = vld [vmem:[%s283 + $0x70] sm:%s276]
                %300 = vst [vmem:[%s284 + $0x38] sm:%s276] %v299
                %v301 = vld [vmem:[%s283 + $0x80] sm:%s276]
                %302 = vst [vmem:[%s284 + $0x40] sm:%s276] %v301
                %v303 = vld [vmem:[%s283 + $0x90] sm:%s276]
                %304 = vst [vmem:[%s284 + $0x48] sm:%s276] %v303
                %v305 = vld [vmem:[%s283 + $0xa0] sm:%s276]
                %306 = vst [vmem:[%s284 + $0x50] sm:%s276] %v305
                %v307 = vld [vmem:[%s283 + $0xb0] sm:%s276]
                %308 = vst [vmem:[%s284 + $0x58] sm:%s276] %v307
                %v309 = vld [vmem:[%s283 + $0xc0] sm:%s276]
                %310 = vst [vmem:[%s284 + $0x60] sm:%s276] %v309
                %v311 = vld [vmem:[%s283 + $0xd0] sm:%s276]
                %312 = vst [vmem:[%s284 + $0x68] sm:%s276] %v311
                %v313 = vld [vmem:[%s283 + $0xe0] sm:%s276]
                %314 = vst [vmem:[%s284 + $0x70] sm:%s276] %v313
                %v315 = vld [vmem:[%s283 + $0xf0] sm:%s276]
                %316 = vst [vmem:[%s284 + $0x78] sm:%s276] %v315
              $region53: #{triplet_loss_adp.1} parent=47 // loop_footer
                %s282 = sadd.s32 1, %s278
              $region54: #{triplet_loss_adp.1} parent=47 // loop_footer_branch
                %277 = sbr.rel target = $region50
              $region55: #{triplet_loss_adp.1} parent=47 // loop_exit
                _
            $region48: #{triplet_loss_adp.1} parent=39 // pred_fallthru
              _
          $region40: #{triplet_loss_adp.1} parent=35 // pred_fallthru
            _
          %361 = vnop
        $region36: #{triplet_loss_adp.1} parent=31 // pred_fallthru
          _
        // Predicated region
        $region71: #{triplet_loss_adp.1} parent=31 // pred_check
          %p362 = pneg %p103
        $region72: #{triplet_loss_adp.1} parent=31 // pred_check_branch
          %364 = sbr.rel (%p362) target = $region74
        $region73: #{triplet_loss_adp.1} parent=31 // pred_region
          %p365 = scmp.lt.s32.totalorder %s15, 1
          %s366 = scalar_select %p365, %s15, 1
          %s367 = scalar_lea.vmem %s3, %s366
        $region74: #{triplet_loss_adp.1} parent=31 // pred_fallthru
          _
        // Predicated region
        $region75: #{triplet_loss_adp.1} parent=31 // pred_check
          %p368 = pneg %p150
        $region76: #{triplet_loss_adp.1} parent=31 // pred_check_branch
          %370 = sbr.rel (%p368) target = $region78
        $region77: #{triplet_loss_adp.1} parent=31 // pred_region
          %p371 = scmp.lt.s32.totalorder %s15, 1
          %s372 = scalar_select %p371, %s15, 1
          %s373 = scalar_lea.vmem %s5, %s372
        $region78: #{triplet_loss_adp.1} parent=31 // pred_fallthru
          _
      $region32: #{triplet_loss_adp.1} parent=5 // pred_fallthru
        _
      %p374 = scmp.le.s32.totalorder 1, %s15
      %p375 = scmp.lt.s32.totalorder %s15, 3
      %p376 = pnand %p374, %p375
      %p377 = pneg %p376
      // Predicated region
      $region79: #{triplet_loss_adp.1} parent=5 // pred_check
        _
      $region80: #{triplet_loss_adp.1} parent=5 // pred_check_branch
        %379 = sbr.rel (%p376) target = $region82
      $region81: #{triplet_loss_adp.1} parent=5 // pred_region
        %s380 = ssub.s32 %s15, 1
        %s381 = sand.u32 %s49, 1
        %s382 = sand.u32 %s49, 1
        %s383 = smul.addr %s382, 128
        %s384 = scalar_lea.vmem [#allocation2], %s383
        // Predicated region
        $region83: #{triplet_loss_adp.1} parent=81 // pred_check
          %p385 = pneg %p62
        $region84: #{triplet_loss_adp.1} parent=81 // pred_check_branch
          %387 = sbr.rel (%p385) target = $region86
        $region85: #{triplet_loss_adp.1} parent=81 // pred_region
          _
        $region86: #{triplet_loss_adp.1} parent=81 // pred_fallthru
          _
        %p388 = pneg %p36
        %p389 = pneg %p33
        %s390 = sand.u32 %s49, 1
        %s391 = sand.u32 %s49, 1
        %s392 = smul.addr %s391, 128
        %s393 = scalar_lea.vmem [#allocation2], %s392
        %p394 = pneg %p62
        %p395 = pneg %p59
        %p396 = pneg %p83
        %p397 = pneg %p80
        %p398 = scmp.lt.s32.totalorder %s20, 1
        %s399 = scalar_select %p398, %s20, 1
        %s400 = scalar_lea.vmem %s3, %s399
        %p401 = pneg %p109
        %p402 = pneg %p106
        %p403 = pneg %p130
        %p404 = pneg %p127
        %p405 = scmp.lt.s32.totalorder %s20, 1
        %s406 = scalar_select %p405, %s20, 1
        %s407 = scalar_lea.vmem %s5, %s406
        %p408 = pneg %p156
        %p409 = pneg %p153
        %p410 = pneg %p177
        %p411 = pneg %p174
        %p412 = pneg %p203
        %p413 = pneg %p200
        %p414 = scmp.lt.s32.totalorder %s20, 1
        %s415 = scalar_select %p414, %s20, 1
        %s416 = scalar_lea.vmem %s7, %s415
        %p417 = pneg %p229
        %p418 = pneg %p226
        %p419 = scmp.lt.s32.totalorder %s20, 1
        %s420 = scalar_select %p419, %s20, 1
        %s421 = scalar_lea.vmem %s8, %s420
        %p422 = scmp.lt.s32.totalorder %s20, 1
        %s423 = scalar_select %p422, %s20, 1
        %s424 = scalar_lea.vmem %s3, %s423
        %p425 = scmp.lt.s32.totalorder %s20, 1
        %s426 = scalar_select %p425, %s20, 1
        %s427 = scalar_lea.vmem %s5, %s426
        %p428 = scmp.lt.s32.totalorder %s20, 1
        %s429 = scalar_select %p428, %s20, 1
        %s430 = scalar_lea.vmem %s7, %s429
        %p431 = scmp.lt.s32.totalorder %s20, 1
        %s432 = scalar_select %p431, %s20, 1
        %s433 = scalar_lea.vmem %s8, %s432
        %v434 = vld [vmem:[%s0] sm:$0xff]
        %v435 = vld [vmem:[%s0 + $0x8] sm:$0xff]
        %v436 = vld [vmem:[%s0 + $0x10] sm:$0xff]
        %v437 = vld [vmem:[%s0 + $0x18] sm:$0xff]
        %v438 = vld [vmem:[%s0 + $0x20] sm:$0xff]
        %v439 = vld [vmem:[%s0 + $0x28] sm:$0xff]
        %v440 = vld [vmem:[%s0 + $0x30] sm:$0xff]
        %v441 = vld [vmem:[%s0 + $0x38] sm:$0xff]
        %v442 = vld [vmem:[%s0 + $0x40] sm:$0xff]
        %v443 = vld [vmem:[%s0 + $0x48] sm:$0xff]
        %v444 = vld [vmem:[%s0 + $0x50] sm:$0xff]
        %v445 = vld [vmem:[%s0 + $0x58] sm:$0xff]
        %v446 = vld [vmem:[%s0 + $0x60] sm:$0xff]
        %v447 = vld [vmem:[%s0 + $0x68] sm:$0xff]
        %v448 = vld [vmem:[%s0 + $0x70] sm:$0xff]
        %v449 = vld [vmem:[%s0 + $0x78] sm:$0xff]
        %v450 = vld [vmem:[%s0 + $0x80] sm:$0xff]
        %v451 = vld [vmem:[%s0 + $0x88] sm:$0xff]
        %v452 = vld [vmem:[%s0 + $0x90] sm:$0xff]
        %v453 = vld [vmem:[%s0 + $0x98] sm:$0xff]
        %v454 = vld [vmem:[%s0 + $0xa0] sm:$0xff]
        %v455 = vld [vmem:[%s0 + $0xa8] sm:$0xff]
        %v456 = vld [vmem:[%s0 + $0xb0] sm:$0xff]
        %v457 = vld [vmem:[%s0 + $0xb8] sm:$0xff]
        %v458 = vld [vmem:[%s0 + $0xc0] sm:$0xff]
        %v459 = vld [vmem:[%s0 + $0xc8] sm:$0xff]
        %v460 = vld [vmem:[%s0 + $0xd0] sm:$0xff]
        %v461 = vld [vmem:[%s0 + $0xd8] sm:$0xff]
        %v462 = vld [vmem:[%s0 + $0xe0] sm:$0xff]
        %v463 = vld [vmem:[%s0 + $0xe8] sm:$0xff]
        %v464 = vld [vmem:[%s0 + $0xf0] sm:$0xff]
        %v465 = vld [vmem:[%s0 + $0xf8] sm:$0xff]
        %v466 = vld [vmem:[%s384] sm:$0xff]
        %v467 = vld [vmem:[%s384 + $0x8] sm:$0xff]
        %v468 = vld [vmem:[%s384 + $0x10] sm:$0xff]
        %v469 = vld [vmem:[%s384 + $0x18] sm:$0xff]
        %v470 = vld [vmem:[%s384 + $0x20] sm:$0xff]
        %v471 = vld [vmem:[%s384 + $0x28] sm:$0xff]
        %v472 = vld [vmem:[%s384 + $0x30] sm:$0xff]
        %v473 = vld [vmem:[%s384 + $0x38] sm:$0xff]
        %v474 = vld [vmem:[%s384 + $0x40] sm:$0xff]
        %v475 = vld [vmem:[%s384 + $0x48] sm:$0xff]
        %v476 = vld [vmem:[%s384 + $0x50] sm:$0xff]
        %v477 = vld [vmem:[%s384 + $0x58] sm:$0xff]
        %v478 = vld [vmem:[%s384 + $0x60] sm:$0xff]
        %v479 = vld [vmem:[%s384 + $0x68] sm:$0xff]
        %v480 = vld [vmem:[%s384 + $0x70] sm:$0xff]
        %v481 = vld [vmem:[%s384 + $0x78] sm:$0xff]
        %482 = vmatpush.msra.mxu0 %v481
        %483 = vmatpush.msra.mxu0 %v480
        %484 = vmatpush.msra.mxu0 %v479
        %485 = vmatpush.msra.mxu0 %v478
        %486 = vmatpush.msra.mxu0 %v477
        %487 = vmatpush.msra.mxu0 %v476
        %488 = vmatpush.msra.mxu0 %v475
        %489 = vmatpush.msra.mxu0 %v474
        %490 = vmatpush.msra.mxu0 %v473
        %491 = vmatpush.msra.mxu0 %v472
        %492 = vmatpush.msra.mxu0 %v471
        %493 = vmatpush.msra.mxu0 %v470
        %494 = vmatpush.msra.mxu0 %v469
        %495 = vmatpush.msra.mxu0 %v468
        %496 = vmatpush.msra.mxu0 %v467
        %497 = vmatpush.msra.mxu0 %v466
        %498 = vmatmul.f32.gmra.mxu0 %v434
        %v499 = vpop.f32.mrf.mxu0
        %v500 = vadd.f32 0.0, %v499
        %501 = vmatmul.f32.gmra.mxu0 %v435
        %v502 = vpop.f32.mrf.mxu0
        %v503 = vadd.f32 0.0, %v502
        %504 = vmatmul.f32.gmra.mxu0 %v436
        %v505 = vpop.f32.mrf.mxu0
        %v506 = vadd.f32 0.0, %v505
        %507 = vmatmul.f32.gmra.mxu0 %v437
        %v508 = vpop.f32.mrf.mxu0
        %v509 = vadd.f32 0.0, %v508
        %510 = vmatmul.f32.gmra.mxu0 %v438
        %v511 = vpop.f32.mrf.mxu0
        %v512 = vadd.f32 0.0, %v511
        %513 = vmatmul.f32.gmra.mxu0 %v439
        %v514 = vpop.f32.mrf.mxu0
        %v515 = vadd.f32 0.0, %v514
        %516 = vmatmul.f32.gmra.mxu0 %v440
        %v517 = vpop.f32.mrf.mxu0
        %v518 = vadd.f32 0.0, %v517
        %519 = vmatmul.f32.gmra.mxu0 %v441
        %v520 = vpop.f32.mrf.mxu0
        %v521 = vadd.f32 0.0, %v520
        %522 = vmatmul.f32.gmra.mxu0 %v442
        %v523 = vpop.f32.mrf.mxu0
        %v524 = vadd.f32 0.0, %v523
        %525 = vmatmul.f32.gmra.mxu0 %v443
        %v526 = vpop.f32.mrf.mxu0
        %v527 = vadd.f32 0.0, %v526
        %528 = vmatmul.f32.gmra.mxu0 %v444
        %v529 = vpop.f32.mrf.mxu0
        %v530 = vadd.f32 0.0, %v529
        %531 = vmatmul.f32.gmra.mxu0 %v445
        %v532 = vpop.f32.mrf.mxu0
        %v533 = vadd.f32 0.0, %v532
        %534 = vmatmul.f32.gmra.mxu0 %v446
        %v535 = vpop.f32.mrf.mxu0
        %v536 = vadd.f32 0.0, %v535
        %537 = vmatmul.f32.gmra.mxu0 %v447
        %v538 = vpop.f32.mrf.mxu0
        %v539 = vadd.f32 0.0, %v538
        %540 = vmatmul.f32.gmra.mxu0 %v448
        %v541 = vpop.f32.mrf.mxu0
        %v542 = vadd.f32 0.0, %v541
        %543 = vmatmul.f32.gmra.mxu0 %v449
        %v544 = vpop.f32.mrf.mxu0
        %v545 = vadd.f32 0.0, %v544
        %546 = vmatmul.f32.gmra.mxu0 %v450
        %v547 = vpop.f32.mrf.mxu0
        %v548 = vadd.f32 0.0, %v547
        %549 = vmatmul.f32.gmra.mxu0 %v451
        %v550 = vpop.f32.mrf.mxu0
        %v551 = vadd.f32 0.0, %v550
        %552 = vmatmul.f32.gmra.mxu0 %v452
        %v553 = vpop.f32.mrf.mxu0
        %v554 = vadd.f32 0.0, %v553
        %555 = vmatmul.f32.gmra.mxu0 %v453
        %v556 = vpop.f32.mrf.mxu0
        %v557 = vadd.f32 0.0, %v556
        %558 = vmatmul.f32.gmra.mxu0 %v454
        %v559 = vpop.f32.mrf.mxu0
        %v560 = vadd.f32 0.0, %v559
        %561 = vmatmul.f32.gmra.mxu0 %v455
        %v562 = vpop.f32.mrf.mxu0
        %v563 = vadd.f32 0.0, %v562
        %564 = vmatmul.f32.gmra.mxu0 %v456
        %v565 = vpop.f32.mrf.mxu0
        %v566 = vadd.f32 0.0, %v565
        %567 = vmatmul.f32.gmra.mxu0 %v457
        %v568 = vpop.f32.mrf.mxu0
        %v569 = vadd.f32 0.0, %v568
        %570 = vmatmul.f32.gmra.mxu0 %v458
        %v571 = vpop.f32.mrf.mxu0
        %v572 = vadd.f32 0.0, %v571
        %573 = vmatmul.f32.gmra.mxu0 %v459
        %v574 = vpop.f32.mrf.mxu0
        %v575 = vadd.f32 0.0, %v574
        %576 = vmatmul.f32.gmra.mxu0 %v460
        %v577 = vpop.f32.mrf.mxu0
        %v578 = vadd.f32 0.0, %v577
        %579 = vmatmul.f32.gmra.mxu0 %v461
        %v580 = vpop.f32.mrf.mxu0
        %v581 = vadd.f32 0.0, %v580
        %582 = vmatmul.f32.gmra.mxu0 %v462
        %v583 = vpop.f32.mrf.mxu0
        %v584 = vadd.f32 0.0, %v583
        %585 = vmatmul.f32.gmra.mxu0 %v463
        %v586 = vpop.f32.mrf.mxu0
        %v587 = vadd.f32 0.0, %v586
        %588 = vmatmul.f32.gmra.mxu0 %v464
        %v589 = vpop.f32.mrf.mxu0
        %v590 = vadd.f32 0.0, %v589
        %591 = vmatmul.f32.gmra.mxu0 %v465
        %v592 = vpop.f32.mrf.mxu0
        %v593 = vadd.f32 0.0, %v592
        %594 = vdwg.mxu0
        %v595 = vld [vmem:[%s4] sm:$0xff]
        %v596 = vld [vmem:[%s4 + $0x8] sm:$0xff]
        %v597 = vld [vmem:[%s4 + $0x10] sm:$0xff]
        %v598 = vld [vmem:[%s4 + $0x18] sm:$0xff]
        %v599 = vld [vmem:[%s4 + $0x20] sm:$0xff]
        %v600 = vld [vmem:[%s4 + $0x28] sm:$0xff]
        %v601 = vld [vmem:[%s4 + $0x30] sm:$0xff]
        %v602 = vld [vmem:[%s4 + $0x38] sm:$0xff]
        %v603 = vld [vmem:[%s4 + $0x40] sm:$0xff]
        %v604 = vld [vmem:[%s4 + $0x48] sm:$0xff]
        %v605 = vld [vmem:[%s4 + $0x50] sm:$0xff]
        %v606 = vld [vmem:[%s4 + $0x58] sm:$0xff]
        %v607 = vld [vmem:[%s4 + $0x60] sm:$0xff]
        %v608 = vld [vmem:[%s4 + $0x68] sm:$0xff]
        %v609 = vld [vmem:[%s4 + $0x70] sm:$0xff]
        %v610 = vld [vmem:[%s4 + $0x78] sm:$0xff]
        %v611 = vld [vmem:[%s4 + $0x80] sm:$0xff]
        %v612 = vld [vmem:[%s4 + $0x88] sm:$0xff]
        %v613 = vld [vmem:[%s4 + $0x90] sm:$0xff]
        %v614 = vld [vmem:[%s4 + $0x98] sm:$0xff]
        %v615 = vld [vmem:[%s4 + $0xa0] sm:$0xff]
        %v616 = vld [vmem:[%s4 + $0xa8] sm:$0xff]
        %v617 = vld [vmem:[%s4 + $0xb0] sm:$0xff]
        %v618 = vld [vmem:[%s4 + $0xb8] sm:$0xff]
        %v619 = vld [vmem:[%s4 + $0xc0] sm:$0xff]
        %v620 = vld [vmem:[%s4 + $0xc8] sm:$0xff]
        %v621 = vld [vmem:[%s4 + $0xd0] sm:$0xff]
        %v622 = vld [vmem:[%s4 + $0xd8] sm:$0xff]
        %v623 = vld [vmem:[%s4 + $0xe0] sm:$0xff]
        %v624 = vld [vmem:[%s4 + $0xe8] sm:$0xff]
        %v625 = vld [vmem:[%s4 + $0xf0] sm:$0xff]
        %v626 = vld [vmem:[%s4 + $0xf8] sm:$0xff]
        %v627 = vld [vmem:[%s427] sm:$0x1]
        %629 = vset.pattern.permute.xlu0 0
        %630 = vperm.xlu0 %629, %v595
        %v631 = vpop.permute.xlu0 %630
        %634 = vset.pattern.permute.xlu0 0
        %635 = vperm.xlu0 %634, %v596
        %v636 = vpop.permute.xlu0 %635
        %639 = vset.pattern.permute.xlu0 0
        %640 = vperm.xlu0 %639, %v597
        %v641 = vpop.permute.xlu0 %640
        %644 = vset.pattern.permute.xlu0 0
        %645 = vperm.xlu0 %644, %v598
        %v646 = vpop.permute.xlu0 %645
        %649 = vset.pattern.permute.xlu0 0
        %650 = vperm.xlu0 %649, %v599
        %v651 = vpop.permute.xlu0 %650
        %654 = vset.pattern.permute.xlu0 0
        %655 = vperm.xlu0 %654, %v600
        %v656 = vpop.permute.xlu0 %655
        %659 = vset.pattern.permute.xlu0 0
        %660 = vperm.xlu0 %659, %v601
        %v661 = vpop.permute.xlu0 %660
        %664 = vset.pattern.permute.xlu0 0
        %665 = vperm.xlu0 %664, %v602
        %v666 = vpop.permute.xlu0 %665
        %669 = vset.pattern.permute.xlu0 0
        %670 = vperm.xlu0 %669, %v603
        %v671 = vpop.permute.xlu0 %670
        %674 = vset.pattern.permute.xlu0 0
        %675 = vperm.xlu0 %674, %v604
        %v676 = vpop.permute.xlu0 %675
        %679 = vset.pattern.permute.xlu0 0
        %680 = vperm.xlu0 %679, %v605
        %v681 = vpop.permute.xlu0 %680
        %684 = vset.pattern.permute.xlu0 0
        %685 = vperm.xlu0 %684, %v606
        %v686 = vpop.permute.xlu0 %685
        %689 = vset.pattern.permute.xlu0 0
        %690 = vperm.xlu0 %689, %v607
        %v691 = vpop.permute.xlu0 %690
        %694 = vset.pattern.permute.xlu0 0
        %695 = vperm.xlu0 %694, %v608
        %v696 = vpop.permute.xlu0 %695
        %699 = vset.pattern.permute.xlu0 0
        %700 = vperm.xlu0 %699, %v609
        %v701 = vpop.permute.xlu0 %700
        %704 = vset.pattern.permute.xlu0 0
        %705 = vperm.xlu0 %704, %v610
        %v706 = vpop.permute.xlu0 %705
        %709 = vset.pattern.permute.xlu0 0
        %710 = vperm.xlu0 %709, %v611
        %v711 = vpop.permute.xlu0 %710
        %714 = vset.pattern.permute.xlu0 0
        %715 = vperm.xlu0 %714, %v612
        %v716 = vpop.permute.xlu0 %715
        %719 = vset.pattern.permute.xlu0 0
        %720 = vperm.xlu0 %719, %v613
        %v721 = vpop.permute.xlu0 %720
        %724 = vset.pattern.permute.xlu0 0
        %725 = vperm.xlu0 %724, %v614
        %v726 = vpop.permute.xlu0 %725
        %729 = vset.pattern.permute.xlu0 0
        %730 = vperm.xlu0 %729, %v615
        %v731 = vpop.permute.xlu0 %730
        %734 = vset.pattern.permute.xlu0 0
        %735 = vperm.xlu0 %734, %v616
        %v736 = vpop.permute.xlu0 %735
        %739 = vset.pattern.permute.xlu0 0
        %740 = vperm.xlu0 %739, %v617
        %v741 = vpop.permute.xlu0 %740
        %744 = vset.pattern.permute.xlu0 0
        %745 = vperm.xlu0 %744, %v618
        %v746 = vpop.permute.xlu0 %745
        %749 = vset.pattern.permute.xlu0 0
        %750 = vperm.xlu0 %749, %v619
        %v751 = vpop.permute.xlu0 %750
        %754 = vset.pattern.permute.xlu0 0
        %755 = vperm.xlu0 %754, %v620
        %v756 = vpop.permute.xlu0 %755
        %759 = vset.pattern.permute.xlu0 0
        %760 = vperm.xlu0 %759, %v621
        %v761 = vpop.permute.xlu0 %760
        %764 = vset.pattern.permute.xlu0 0
        %765 = vperm.xlu0 %764, %v622
        %v766 = vpop.permute.xlu0 %765
        %769 = vset.pattern.permute.xlu0 0
        %770 = vperm.xlu0 %769, %v623
        %v771 = vpop.permute.xlu0 %770
        %774 = vset.pattern.permute.xlu0 0
        %775 = vperm.xlu0 %774, %v624
        %v776 = vpop.permute.xlu0 %775
        %779 = vset.pattern.permute.xlu0 0
        %780 = vperm.xlu0 %779, %v625
        %v781 = vpop.permute.xlu0 %780
        %784 = vset.pattern.permute.xlu0 0
        %785 = vperm.xlu0 %784, %v626
        %v786 = vpop.permute.xlu0 %785
        %v789 = vperm.slane %v627, 0
        %v791 = vadd.f32 %v631, %v789
        %v792 = vadd.f32 %v636, %v789
        %v793 = vadd.f32 %v641, %v789
        %v794 = vadd.f32 %v646, %v789
        %v795 = vadd.f32 %v651, %v789
        %v796 = vadd.f32 %v656, %v789
        %v797 = vadd.f32 %v661, %v789
        %v798 = vadd.f32 %v666, %v789
        %v799 = vadd.f32 %v671, %v789
        %v800 = vadd.f32 %v676, %v789
        %v801 = vadd.f32 %v681, %v789
        %v802 = vadd.f32 %v686, %v789
        %v803 = vadd.f32 %v691, %v789
        %v804 = vadd.f32 %v696, %v789
        %v805 = vadd.f32 %v701, %v789
        %v806 = vadd.f32 %v706, %v789
        %v807 = vadd.f32 %v711, %v789
        %v808 = vadd.f32 %v716, %v789
        %v809 = vadd.f32 %v721, %v789
        %v810 = vadd.f32 %v726, %v789
        %v811 = vadd.f32 %v731, %v789
        %v812 = vadd.f32 %v736, %v789
        %v813 = vadd.f32 %v741, %v789
        %v814 = vadd.f32 %v746, %v789
        %v815 = vadd.f32 %v751, %v789
        %v816 = vadd.f32 %v756, %v789
        %v817 = vadd.f32 %v761, %v789
        %v818 = vadd.f32 %v766, %v789
        %v819 = vadd.f32 %v771, %v789
        %v820 = vadd.f32 %v776, %v789
        %v821 = vadd.f32 %v781, %v789
        %v822 = vadd.f32 %v786, %v789
        %v823 = vmul.f32 %v500, 2.0
        %v824 = vmul.f32 %v503, 2.0
        %v825 = vmul.f32 %v506, 2.0
        %v826 = vmul.f32 %v509, 2.0
        %v827 = vmul.f32 %v512, 2.0
        %v828 = vmul.f32 %v515, 2.0
        %v829 = vmul.f32 %v518, 2.0
        %v830 = vmul.f32 %v521, 2.0
        %v831 = vmul.f32 %v524, 2.0
        %v832 = vmul.f32 %v527, 2.0
        %v833 = vmul.f32 %v530, 2.0
        %v834 = vmul.f32 %v533, 2.0
        %v835 = vmul.f32 %v536, 2.0
        %v836 = vmul.f32 %v539, 2.0
        %v837 = vmul.f32 %v542, 2.0
        %v838 = vmul.f32 %v545, 2.0
        %v839 = vmul.f32 %v548, 2.0
        %v840 = vmul.f32 %v551, 2.0
        %v841 = vmul.f32 %v554, 2.0
        %v842 = vmul.f32 %v557, 2.0
        %v843 = vmul.f32 %v560, 2.0
        %v844 = vmul.f32 %v563, 2.0
        %v845 = vmul.f32 %v566, 2.0
        %v846 = vmul.f32 %v569, 2.0
        %v847 = vmul.f32 %v572, 2.0
        %v848 = vmul.f32 %v575, 2.0
        %v849 = vmul.f32 %v578, 2.0
        %v850 = vmul.f32 %v581, 2.0
        %v851 = vmul.f32 %v584, 2.0
        %v852 = vmul.f32 %v587, 2.0
        %v853 = vmul.f32 %v590, 2.0
        %v854 = vmul.f32 %v593, 2.0
        %v855 = vsub.f32 %v791, %v823
        %v856 = vsub.f32 %v792, %v824
        %v857 = vsub.f32 %v793, %v825
        %v858 = vsub.f32 %v794, %v826
        %v859 = vsub.f32 %v795, %v827
        %v860 = vsub.f32 %v796, %v828
        %v861 = vsub.f32 %v797, %v829
        %v862 = vsub.f32 %v798, %v830
        %v863 = vsub.f32 %v799, %v831
        %v864 = vsub.f32 %v800, %v832
        %v865 = vsub.f32 %v801, %v833
        %v866 = vsub.f32 %v802, %v834
        %v867 = vsub.f32 %v803, %v835
        %v868 = vsub.f32 %v804, %v836
        %v869 = vsub.f32 %v805, %v837
        %v870 = vsub.f32 %v806, %v838
        %v871 = vsub.f32 %v807, %v839
        %v872 = vsub.f32 %v808, %v840
        %v873 = vsub.f32 %v809, %v841
        %v874 = vsub.f32 %v810, %v842
        %v875 = vsub.f32 %v811, %v843
        %v876 = vsub.f32 %v812, %v844
        %v877 = vsub.f32 %v813, %v845
        %v878 = vsub.f32 %v814, %v846
        %v879 = vsub.f32 %v815, %v847
        %v880 = vsub.f32 %v816, %v848
        %v881 = vsub.f32 %v817, %v849
        %v882 = vsub.f32 %v818, %v850
        %v883 = vsub.f32 %v819, %v851
        %v884 = vsub.f32 %v820, %v852
        %v885 = vsub.f32 %v821, %v853
        %v886 = vsub.f32 %v822, %v854
        %v887 = vmax.f32 %v855, 1e-12
        %v888 = vmax.f32 %v856, 1e-12
        %v889 = vmax.f32 %v857, 1e-12
        %v890 = vmax.f32 %v858, 1e-12
        %v891 = vmax.f32 %v859, 1e-12
        %v892 = vmax.f32 %v860, 1e-12
        %v893 = vmax.f32 %v861, 1e-12
        %v894 = vmax.f32 %v862, 1e-12
        %v895 = vmax.f32 %v863, 1e-12
        %v896 = vmax.f32 %v864, 1e-12
        %v897 = vmax.f32 %v865, 1e-12
        %v898 = vmax.f32 %v866, 1e-12
        %v899 = vmax.f32 %v867, 1e-12
        %v900 = vmax.f32 %v868, 1e-12
        %v901 = vmax.f32 %v869, 1e-12
        %v902 = vmax.f32 %v870, 1e-12
        %v903 = vmax.f32 %v871, 1e-12
        %v904 = vmax.f32 %v872, 1e-12
        %v905 = vmax.f32 %v873, 1e-12
        %v906 = vmax.f32 %v874, 1e-12
        %v907 = vmax.f32 %v875, 1e-12
        %v908 = vmax.f32 %v876, 1e-12
        %v909 = vmax.f32 %v877, 1e-12
        %v910 = vmax.f32 %v878, 1e-12
        %v911 = vmax.f32 %v879, 1e-12
        %v912 = vmax.f32 %v880, 1e-12
        %v913 = vmax.f32 %v881, 1e-12
        %v914 = vmax.f32 %v882, 1e-12
        %v915 = vmax.f32 %v883, 1e-12
        %v916 = vmax.f32 %v884, 1e-12
        %v917 = vmax.f32 %v885, 1e-12
        %v918 = vmax.f32 %v886, 1e-12
        %v919 = vrsqrt.pop %v887
        %v920 = vmul.f32 %v919, %v887
        %v921 = vmul.f32 %v920, %v919
        %v922 = vmul.f32 0.5, %v921
        %v923 = vsub.f32 1.5, %v922
        %v924 = vmul.f32 %v919, %v923
        %v925 = vmul.f32 %v887, %v924
        %vm926 = vcmp.eq.f32.partialorder %v887, inf
        %v927 = vsel %vm926, %v887, %v925
        %vm928 = vcmp.eq.f32.partialorder %v887, 0.0
        %v929 = vand.u32 %v887, 2147483648
        %v930 = vsel %vm928, %v929, %v927
        %v931 = vrsqrt.pop %v888
        %v932 = vmul.f32 %v931, %v888
        %v933 = vmul.f32 %v932, %v931
        %v934 = vmul.f32 0.5, %v933
        %v935 = vsub.f32 1.5, %v934
        %v936 = vmul.f32 %v931, %v935
        %v937 = vmul.f32 %v888, %v936
        %vm938 = vcmp.eq.f32.partialorder %v888, inf
        %v939 = vsel %vm938, %v888, %v937
        %vm940 = vcmp.eq.f32.partialorder %v888, 0.0
        %v941 = vand.u32 %v888, 2147483648
        %v942 = vsel %vm940, %v941, %v939
        %v943 = vrsqrt.pop %v889
        %v944 = vmul.f32 %v943, %v889
        %v945 = vmul.f32 %v944, %v943
        %v946 = vmul.f32 0.5, %v945
        %v947 = vsub.f32 1.5, %v946
        %v948 = vmul.f32 %v943, %v947
        %v949 = vmul.f32 %v889, %v948
        %vm950 = vcmp.eq.f32.partialorder %v889, inf
        %v951 = vsel %vm950, %v889, %v949
        %vm952 = vcmp.eq.f32.partialorder %v889, 0.0
        %v953 = vand.u32 %v889, 2147483648
        %v954 = vsel %vm952, %v953, %v951
        %v955 = vrsqrt.pop %v890
        %v956 = vmul.f32 %v955, %v890
        %v957 = vmul.f32 %v956, %v955
        %v958 = vmul.f32 0.5, %v957
        %v959 = vsub.f32 1.5, %v958
        %v960 = vmul.f32 %v955, %v959
        %v961 = vmul.f32 %v890, %v960
        %vm962 = vcmp.eq.f32.partialorder %v890, inf
        %v963 = vsel %vm962, %v890, %v961
        %vm964 = vcmp.eq.f32.partialorder %v890, 0.0
        %v965 = vand.u32 %v890, 2147483648
        %v966 = vsel %vm964, %v965, %v963
        %v967 = vrsqrt.pop %v891
        %v968 = vmul.f32 %v967, %v891
        %v969 = vmul.f32 %v968, %v967
        %v970 = vmul.f32 0.5, %v969
        %v971 = vsub.f32 1.5, %v970
        %v972 = vmul.f32 %v967, %v971
        %v973 = vmul.f32 %v891, %v972
        %vm974 = vcmp.eq.f32.partialorder %v891, inf
        %v975 = vsel %vm974, %v891, %v973
        %vm976 = vcmp.eq.f32.partialorder %v891, 0.0
        %v977 = vand.u32 %v891, 2147483648
        %v978 = vsel %vm976, %v977, %v975
        %v979 = vrsqrt.pop %v892
        %v980 = vmul.f32 %v979, %v892
        %v981 = vmul.f32 %v980, %v979
        %v982 = vmul.f32 0.5, %v981
        %v983 = vsub.f32 1.5, %v982
        %v984 = vmul.f32 %v979, %v983
        %v985 = vmul.f32 %v892, %v984
        %vm986 = vcmp.eq.f32.partialorder %v892, inf
        %v987 = vsel %vm986, %v892, %v985
        %vm988 = vcmp.eq.f32.partialorder %v892, 0.0
        %v989 = vand.u32 %v892, 2147483648
        %v990 = vsel %vm988, %v989, %v987
        %v991 = vrsqrt.pop %v893
        %v992 = vmul.f32 %v991, %v893
        %v993 = vmul.f32 %v992, %v991
        %v994 = vmul.f32 0.5, %v993
        %v995 = vsub.f32 1.5, %v994
        %v996 = vmul.f32 %v991, %v995
        %v997 = vmul.f32 %v893, %v996
        %vm998 = vcmp.eq.f32.partialorder %v893, inf
        %v999 = vsel %vm998, %v893, %v997
        %vm1000 = vcmp.eq.f32.partialorder %v893, 0.0
        %v1001 = vand.u32 %v893, 2147483648
        %v1002 = vsel %vm1000, %v1001, %v999
        %v1003 = vrsqrt.pop %v894
        %v1004 = vmul.f32 %v1003, %v894
        %v1005 = vmul.f32 %v1004, %v1003
        %v1006 = vmul.f32 0.5, %v1005
        %v1007 = vsub.f32 1.5, %v1006
        %v1008 = vmul.f32 %v1003, %v1007
        %v1009 = vmul.f32 %v894, %v1008
        %vm1010 = vcmp.eq.f32.partialorder %v894, inf
        %v1011 = vsel %vm1010, %v894, %v1009
        %vm1012 = vcmp.eq.f32.partialorder %v894, 0.0
        %v1013 = vand.u32 %v894, 2147483648
        %v1014 = vsel %vm1012, %v1013, %v1011
        %v1015 = vrsqrt.pop %v895
        %v1016 = vmul.f32 %v1015, %v895
        %v1017 = vmul.f32 %v1016, %v1015
        %v1018 = vmul.f32 0.5, %v1017
        %v1019 = vsub.f32 1.5, %v1018
        %v1020 = vmul.f32 %v1015, %v1019
        %v1021 = vmul.f32 %v895, %v1020
        %vm1022 = vcmp.eq.f32.partialorder %v895, inf
        %v1023 = vsel %vm1022, %v895, %v1021
        %vm1024 = vcmp.eq.f32.partialorder %v895, 0.0
        %v1025 = vand.u32 %v895, 2147483648
        %v1026 = vsel %vm1024, %v1025, %v1023
        %v1027 = vrsqrt.pop %v896
        %v1028 = vmul.f32 %v1027, %v896
        %v1029 = vmul.f32 %v1028, %v1027
        %v1030 = vmul.f32 0.5, %v1029
        %v1031 = vsub.f32 1.5, %v1030
        %v1032 = vmul.f32 %v1027, %v1031
        %v1033 = vmul.f32 %v896, %v1032
        %vm1034 = vcmp.eq.f32.partialorder %v896, inf
        %v1035 = vsel %vm1034, %v896, %v1033
        %vm1036 = vcmp.eq.f32.partialorder %v896, 0.0
        %v1037 = vand.u32 %v896, 2147483648
        %v1038 = vsel %vm1036, %v1037, %v1035
        %v1039 = vrsqrt.pop %v897
        %v1040 = vmul.f32 %v1039, %v897
        %v1041 = vmul.f32 %v1040, %v1039
        %v1042 = vmul.f32 0.5, %v1041
        %v1043 = vsub.f32 1.5, %v1042
        %v1044 = vmul.f32 %v1039, %v1043
        %v1045 = vmul.f32 %v897, %v1044
        %vm1046 = vcmp.eq.f32.partialorder %v897, inf
        %v1047 = vsel %vm1046, %v897, %v1045
        %vm1048 = vcmp.eq.f32.partialorder %v897, 0.0
        %v1049 = vand.u32 %v897, 2147483648
        %v1050 = vsel %vm1048, %v1049, %v1047
        %v1051 = vrsqrt.pop %v898
        %v1052 = vmul.f32 %v1051, %v898
        %v1053 = vmul.f32 %v1052, %v1051
        %v1054 = vmul.f32 0.5, %v1053
        %v1055 = vsub.f32 1.5, %v1054
        %v1056 = vmul.f32 %v1051, %v1055
        %v1057 = vmul.f32 %v898, %v1056
        %vm1058 = vcmp.eq.f32.partialorder %v898, inf
        %v1059 = vsel %vm1058, %v898, %v1057
        %vm1060 = vcmp.eq.f32.partialorder %v898, 0.0
        %v1061 = vand.u32 %v898, 2147483648
        %v1062 = vsel %vm1060, %v1061, %v1059
        %v1063 = vrsqrt.pop %v899
        %v1064 = vmul.f32 %v1063, %v899
        %v1065 = vmul.f32 %v1064, %v1063
        %v1066 = vmul.f32 0.5, %v1065
        %v1067 = vsub.f32 1.5, %v1066
        %v1068 = vmul.f32 %v1063, %v1067
        %v1069 = vmul.f32 %v899, %v1068
        %vm1070 = vcmp.eq.f32.partialorder %v899, inf
        %v1071 = vsel %vm1070, %v899, %v1069
        %vm1072 = vcmp.eq.f32.partialorder %v899, 0.0
        %v1073 = vand.u32 %v899, 2147483648
        %v1074 = vsel %vm1072, %v1073, %v1071
        %v1075 = vrsqrt.pop %v900
        %v1076 = vmul.f32 %v1075, %v900
        %v1077 = vmul.f32 %v1076, %v1075
        %v1078 = vmul.f32 0.5, %v1077
        %v1079 = vsub.f32 1.5, %v1078
        %v1080 = vmul.f32 %v1075, %v1079
        %v1081 = vmul.f32 %v900, %v1080
        %vm1082 = vcmp.eq.f32.partialorder %v900, inf
        %v1083 = vsel %vm1082, %v900, %v1081
        %vm1084 = vcmp.eq.f32.partialorder %v900, 0.0
        %v1085 = vand.u32 %v900, 2147483648
        %v1086 = vsel %vm1084, %v1085, %v1083
        %v1087 = vrsqrt.pop %v901
        %v1088 = vmul.f32 %v1087, %v901
        %v1089 = vmul.f32 %v1088, %v1087
        %v1090 = vmul.f32 0.5, %v1089
        %v1091 = vsub.f32 1.5, %v1090
        %v1092 = vmul.f32 %v1087, %v1091
        %v1093 = vmul.f32 %v901, %v1092
        %vm1094 = vcmp.eq.f32.partialorder %v901, inf
        %v1095 = vsel %vm1094, %v901, %v1093
        %vm1096 = vcmp.eq.f32.partialorder %v901, 0.0
        %v1097 = vand.u32 %v901, 2147483648
        %v1098 = vsel %vm1096, %v1097, %v1095
        %v1099 = vrsqrt.pop %v902
        %v1100 = vmul.f32 %v1099, %v902
        %v1101 = vmul.f32 %v1100, %v1099
        %v1102 = vmul.f32 0.5, %v1101
        %v1103 = vsub.f32 1.5, %v1102
        %v1104 = vmul.f32 %v1099, %v1103
        %v1105 = vmul.f32 %v902, %v1104
        %vm1106 = vcmp.eq.f32.partialorder %v902, inf
        %v1107 = vsel %vm1106, %v902, %v1105
        %vm1108 = vcmp.eq.f32.partialorder %v902, 0.0
        %v1109 = vand.u32 %v902, 2147483648
        %v1110 = vsel %vm1108, %v1109, %v1107
        %v1111 = vrsqrt.pop %v903
        %v1112 = vmul.f32 %v1111, %v903
        %v1113 = vmul.f32 %v1112, %v1111
        %v1114 = vmul.f32 0.5, %v1113
        %v1115 = vsub.f32 1.5, %v1114
        %v1116 = vmul.f32 %v1111, %v1115
        %v1117 = vmul.f32 %v903, %v1116
        %vm1118 = vcmp.eq.f32.partialorder %v903, inf
        %v1119 = vsel %vm1118, %v903, %v1117
        %vm1120 = vcmp.eq.f32.partialorder %v903, 0.0
        %v1121 = vand.u32 %v903, 2147483648
        %v1122 = vsel %vm1120, %v1121, %v1119
        %v1123 = vrsqrt.pop %v904
        %v1124 = vmul.f32 %v1123, %v904
        %v1125 = vmul.f32 %v1124, %v1123
        %v1126 = vmul.f32 0.5, %v1125
        %v1127 = vsub.f32 1.5, %v1126
        %v1128 = vmul.f32 %v1123, %v1127
        %v1129 = vmul.f32 %v904, %v1128
        %vm1130 = vcmp.eq.f32.partialorder %v904, inf
        %v1131 = vsel %vm1130, %v904, %v1129
        %vm1132 = vcmp.eq.f32.partialorder %v904, 0.0
        %v1133 = vand.u32 %v904, 2147483648
        %v1134 = vsel %vm1132, %v1133, %v1131
        %v1135 = vrsqrt.pop %v905
        %v1136 = vmul.f32 %v1135, %v905
        %v1137 = vmul.f32 %v1136, %v1135
        %v1138 = vmul.f32 0.5, %v1137
        %v1139 = vsub.f32 1.5, %v1138
        %v1140 = vmul.f32 %v1135, %v1139
        %v1141 = vmul.f32 %v905, %v1140
        %vm1142 = vcmp.eq.f32.partialorder %v905, inf
        %v1143 = vsel %vm1142, %v905, %v1141
        %vm1144 = vcmp.eq.f32.partialorder %v905, 0.0
        %v1145 = vand.u32 %v905, 2147483648
        %v1146 = vsel %vm1144, %v1145, %v1143
        %v1147 = vrsqrt.pop %v906
        %v1148 = vmul.f32 %v1147, %v906
        %v1149 = vmul.f32 %v1148, %v1147
        %v1150 = vmul.f32 0.5, %v1149
        %v1151 = vsub.f32 1.5, %v1150
        %v1152 = vmul.f32 %v1147, %v1151
        %v1153 = vmul.f32 %v906, %v1152
        %vm1154 = vcmp.eq.f32.partialorder %v906, inf
        %v1155 = vsel %vm1154, %v906, %v1153
        %vm1156 = vcmp.eq.f32.partialorder %v906, 0.0
        %v1157 = vand.u32 %v906, 2147483648
        %v1158 = vsel %vm1156, %v1157, %v1155
        %v1159 = vrsqrt.pop %v907
        %v1160 = vmul.f32 %v1159, %v907
        %v1161 = vmul.f32 %v1160, %v1159
        %v1162 = vmul.f32 0.5, %v1161
        %v1163 = vsub.f32 1.5, %v1162
        %v1164 = vmul.f32 %v1159, %v1163
        %v1165 = vmul.f32 %v907, %v1164
        %vm1166 = vcmp.eq.f32.partialorder %v907, inf
        %v1167 = vsel %vm1166, %v907, %v1165
        %vm1168 = vcmp.eq.f32.partialorder %v907, 0.0
        %v1169 = vand.u32 %v907, 2147483648
        %v1170 = vsel %vm1168, %v1169, %v1167
        %v1171 = vrsqrt.pop %v908
        %v1172 = vmul.f32 %v1171, %v908
        %v1173 = vmul.f32 %v1172, %v1171
        %v1174 = vmul.f32 0.5, %v1173
        %v1175 = vsub.f32 1.5, %v1174
        %v1176 = vmul.f32 %v1171, %v1175
        %v1177 = vmul.f32 %v908, %v1176
        %vm1178 = vcmp.eq.f32.partialorder %v908, inf
        %v1179 = vsel %vm1178, %v908, %v1177
        %vm1180 = vcmp.eq.f32.partialorder %v908, 0.0
        %v1181 = vand.u32 %v908, 2147483648
        %v1182 = vsel %vm1180, %v1181, %v1179
        %v1183 = vrsqrt.pop %v909
        %v1184 = vmul.f32 %v1183, %v909
        %v1185 = vmul.f32 %v1184, %v1183
        %v1186 = vmul.f32 0.5, %v1185
        %v1187 = vsub.f32 1.5, %v1186
        %v1188 = vmul.f32 %v1183, %v1187
        %v1189 = vmul.f32 %v909, %v1188
        %vm1190 = vcmp.eq.f32.partialorder %v909, inf
        %v1191 = vsel %vm1190, %v909, %v1189
        %vm1192 = vcmp.eq.f32.partialorder %v909, 0.0
        %v1193 = vand.u32 %v909, 2147483648
        %v1194 = vsel %vm1192, %v1193, %v1191
        %v1195 = vrsqrt.pop %v910
        %v1196 = vmul.f32 %v1195, %v910
        %v1197 = vmul.f32 %v1196, %v1195
        %v1198 = vmul.f32 0.5, %v1197
        %v1199 = vsub.f32 1.5, %v1198
        %v1200 = vmul.f32 %v1195, %v1199
        %v1201 = vmul.f32 %v910, %v1200
        %vm1202 = vcmp.eq.f32.partialorder %v910, inf
        %v1203 = vsel %vm1202, %v910, %v1201
        %vm1204 = vcmp.eq.f32.partialorder %v910, 0.0
        %v1205 = vand.u32 %v910, 2147483648
        %v1206 = vsel %vm1204, %v1205, %v1203
        %v1207 = vrsqrt.pop %v911
        %v1208 = vmul.f32 %v1207, %v911
        %v1209 = vmul.f32 %v1208, %v1207
        %v1210 = vmul.f32 0.5, %v1209
        %v1211 = vsub.f32 1.5, %v1210
        %v1212 = vmul.f32 %v1207, %v1211
        %v1213 = vmul.f32 %v911, %v1212
        %vm1214 = vcmp.eq.f32.partialorder %v911, inf
        %v1215 = vsel %vm1214, %v911, %v1213
        %vm1216 = vcmp.eq.f32.partialorder %v911, 0.0
        %v1217 = vand.u32 %v911, 2147483648
        %v1218 = vsel %vm1216, %v1217, %v1215
        %v1219 = vrsqrt.pop %v912
        %v1220 = vmul.f32 %v1219, %v912
        %v1221 = vmul.f32 %v1220, %v1219
        %v1222 = vmul.f32 0.5, %v1221
        %v1223 = vsub.f32 1.5, %v1222
        %v1224 = vmul.f32 %v1219, %v1223
        %v1225 = vmul.f32 %v912, %v1224
        %vm1226 = vcmp.eq.f32.partialorder %v912, inf
        %v1227 = vsel %vm1226, %v912, %v1225
        %vm1228 = vcmp.eq.f32.partialorder %v912, 0.0
        %v1229 = vand.u32 %v912, 2147483648
        %v1230 = vsel %vm1228, %v1229, %v1227
        %v1231 = vrsqrt.pop %v913
        %v1232 = vmul.f32 %v1231, %v913
        %v1233 = vmul.f32 %v1232, %v1231
        %v1234 = vmul.f32 0.5, %v1233
        %v1235 = vsub.f32 1.5, %v1234
        %v1236 = vmul.f32 %v1231, %v1235
        %v1237 = vmul.f32 %v913, %v1236
        %vm1238 = vcmp.eq.f32.partialorder %v913, inf
        %v1239 = vsel %vm1238, %v913, %v1237
        %vm1240 = vcmp.eq.f32.partialorder %v913, 0.0
        %v1241 = vand.u32 %v913, 2147483648
        %v1242 = vsel %vm1240, %v1241, %v1239
        %v1243 = vrsqrt.pop %v914
        %v1244 = vmul.f32 %v1243, %v914
        %v1245 = vmul.f32 %v1244, %v1243
        %v1246 = vmul.f32 0.5, %v1245
        %v1247 = vsub.f32 1.5, %v1246
        %v1248 = vmul.f32 %v1243, %v1247
        %v1249 = vmul.f32 %v914, %v1248
        %vm1250 = vcmp.eq.f32.partialorder %v914, inf
        %v1251 = vsel %vm1250, %v914, %v1249
        %vm1252 = vcmp.eq.f32.partialorder %v914, 0.0
        %v1253 = vand.u32 %v914, 2147483648
        %v1254 = vsel %vm1252, %v1253, %v1251
        %v1255 = vrsqrt.pop %v915
        %v1256 = vmul.f32 %v1255, %v915
        %v1257 = vmul.f32 %v1256, %v1255
        %v1258 = vmul.f32 0.5, %v1257
        %v1259 = vsub.f32 1.5, %v1258
        %v1260 = vmul.f32 %v1255, %v1259
        %v1261 = vmul.f32 %v915, %v1260
        %vm1262 = vcmp.eq.f32.partialorder %v915, inf
        %v1263 = vsel %vm1262, %v915, %v1261
        %vm1264 = vcmp.eq.f32.partialorder %v915, 0.0
        %v1265 = vand.u32 %v915, 2147483648
        %v1266 = vsel %vm1264, %v1265, %v1263
        %v1267 = vrsqrt.pop %v916
        %v1268 = vmul.f32 %v1267, %v916
        %v1269 = vmul.f32 %v1268, %v1267
        %v1270 = vmul.f32 0.5, %v1269
        %v1271 = vsub.f32 1.5, %v1270
        %v1272 = vmul.f32 %v1267, %v1271
        %v1273 = vmul.f32 %v916, %v1272
        %vm1274 = vcmp.eq.f32.partialorder %v916, inf
        %v1275 = vsel %vm1274, %v916, %v1273
        %vm1276 = vcmp.eq.f32.partialorder %v916, 0.0
        %v1277 = vand.u32 %v916, 2147483648
        %v1278 = vsel %vm1276, %v1277, %v1275
        %v1279 = vrsqrt.pop %v917
        %v1280 = vmul.f32 %v1279, %v917
        %v1281 = vmul.f32 %v1280, %v1279
        %v1282 = vmul.f32 0.5, %v1281
        %v1283 = vsub.f32 1.5, %v1282
        %v1284 = vmul.f32 %v1279, %v1283
        %v1285 = vmul.f32 %v917, %v1284
        %vm1286 = vcmp.eq.f32.partialorder %v917, inf
        %v1287 = vsel %vm1286, %v917, %v1285
        %vm1288 = vcmp.eq.f32.partialorder %v917, 0.0
        %v1289 = vand.u32 %v917, 2147483648
        %v1290 = vsel %vm1288, %v1289, %v1287
        %v1291 = vrsqrt.pop %v918
        %v1292 = vmul.f32 %v1291, %v918
        %v1293 = vmul.f32 %v1292, %v1291
        %v1294 = vmul.f32 0.5, %v1293
        %v1295 = vsub.f32 1.5, %v1294
        %v1296 = vmul.f32 %v1291, %v1295
        %v1297 = vmul.f32 %v918, %v1296
        %vm1298 = vcmp.eq.f32.partialorder %v918, inf
        %v1299 = vsel %vm1298, %v918, %v1297
        %vm1300 = vcmp.eq.f32.partialorder %v918, 0.0
        %v1301 = vand.u32 %v918, 2147483648
        %v1302 = vsel %vm1300, %v1301, %v1299
        %v1303 = vld [vmem:[%s6] sm:$0xff]
        %v1304 = vld [vmem:[%s6 + $0x8] sm:$0xff]
        %v1305 = vld [vmem:[%s6 + $0x10] sm:$0xff]
        %v1306 = vld [vmem:[%s6 + $0x18] sm:$0xff]
        %v1307 = vld [vmem:[%s6 + $0x20] sm:$0xff]
        %v1308 = vld [vmem:[%s6 + $0x28] sm:$0xff]
        %v1309 = vld [vmem:[%s6 + $0x30] sm:$0xff]
        %v1310 = vld [vmem:[%s6 + $0x38] sm:$0xff]
        %v1311 = vld [vmem:[%s6 + $0x40] sm:$0xff]
        %v1312 = vld [vmem:[%s6 + $0x48] sm:$0xff]
        %v1313 = vld [vmem:[%s6 + $0x50] sm:$0xff]
        %v1314 = vld [vmem:[%s6 + $0x58] sm:$0xff]
        %v1315 = vld [vmem:[%s6 + $0x60] sm:$0xff]
        %v1316 = vld [vmem:[%s6 + $0x68] sm:$0xff]
        %v1317 = vld [vmem:[%s6 + $0x70] sm:$0xff]
        %v1318 = vld [vmem:[%s6 + $0x78] sm:$0xff]
        %v1319 = vld [vmem:[%s6 + $0x80] sm:$0xff]
        %v1320 = vld [vmem:[%s6 + $0x88] sm:$0xff]
        %v1321 = vld [vmem:[%s6 + $0x90] sm:$0xff]
        %v1322 = vld [vmem:[%s6 + $0x98] sm:$0xff]
        %v1323 = vld [vmem:[%s6 + $0xa0] sm:$0xff]
        %v1324 = vld [vmem:[%s6 + $0xa8] sm:$0xff]
        %v1325 = vld [vmem:[%s6 + $0xb0] sm:$0xff]
        %v1326 = vld [vmem:[%s6 + $0xb8] sm:$0xff]
        %v1327 = vld [vmem:[%s6 + $0xc0] sm:$0xff]
        %v1328 = vld [vmem:[%s6 + $0xc8] sm:$0xff]
        %v1329 = vld [vmem:[%s6 + $0xd0] sm:$0xff]
        %v1330 = vld [vmem:[%s6 + $0xd8] sm:$0xff]
        %v1331 = vld [vmem:[%s6 + $0xe0] sm:$0xff]
        %v1332 = vld [vmem:[%s6 + $0xe8] sm:$0xff]
        %v1333 = vld [vmem:[%s6 + $0xf0] sm:$0xff]
        %v1334 = vld [vmem:[%s6 + $0xf8] sm:$0xff]
        %v1335 = vld [vmem:[%s2] sm:$0xff]
        %v1336 = vld [vmem:[%s2 + $0x8] sm:$0xff]
        %v1337 = vld [vmem:[%s2 + $0x10] sm:$0xff]
        %v1338 = vld [vmem:[%s2 + $0x18] sm:$0xff]
        %v1339 = vld [vmem:[%s2 + $0x20] sm:$0xff]
        %v1340 = vld [vmem:[%s2 + $0x28] sm:$0xff]
        %v1341 = vld [vmem:[%s2 + $0x30] sm:$0xff]
        %v1342 = vld [vmem:[%s2 + $0x38] sm:$0xff]
        %v1343 = vld [vmem:[%s2 + $0x40] sm:$0xff]
        %v1344 = vld [vmem:[%s2 + $0x48] sm:$0xff]
        %v1345 = vld [vmem:[%s2 + $0x50] sm:$0xff]
        %v1346 = vld [vmem:[%s2 + $0x58] sm:$0xff]
        %v1347 = vld [vmem:[%s2 + $0x60] sm:$0xff]
        %v1348 = vld [vmem:[%s2 + $0x68] sm:$0xff]
        %v1349 = vld [vmem:[%s2 + $0x70] sm:$0xff]
        %v1350 = vld [vmem:[%s2 + $0x78] sm:$0xff]
        %v1351 = vld [vmem:[%s2 + $0x80] sm:$0xff]
        %v1352 = vld [vmem:[%s2 + $0x88] sm:$0xff]
        %v1353 = vld [vmem:[%s2 + $0x90] sm:$0xff]
        %v1354 = vld [vmem:[%s2 + $0x98] sm:$0xff]
        %v1355 = vld [vmem:[%s2 + $0xa0] sm:$0xff]
        %v1356 = vld [vmem:[%s2 + $0xa8] sm:$0xff]
        %v1357 = vld [vmem:[%s2 + $0xb0] sm:$0xff]
        %v1358 = vld [vmem:[%s2 + $0xb8] sm:$0xff]
        %v1359 = vld [vmem:[%s2 + $0xc0] sm:$0xff]
        %v1360 = vld [vmem:[%s2 + $0xc8] sm:$0xff]
        %v1361 = vld [vmem:[%s2 + $0xd0] sm:$0xff]
        %v1362 = vld [vmem:[%s2 + $0xd8] sm:$0xff]
        %v1363 = vld [vmem:[%s2 + $0xe0] sm:$0xff]
        %v1364 = vld [vmem:[%s2 + $0xe8] sm:$0xff]
        %v1365 = vld [vmem:[%s2 + $0xf0] sm:$0xff]
        %v1366 = vld [vmem:[%s2 + $0xf8] sm:$0xff]
        %v1367 = vld [vmem:[%s424] sm:$0x1]
        %1368 = vset.pattern.permute.xlu0 0
        %1369 = vperm.xlu0 %1368, %v1335
        %v1370 = vpop.permute.xlu0 %1369
        %1371 = vset.pattern.permute.xlu0 0
        %1372 = vperm.xlu0 %1371, %v1336
        %v1373 = vpop.permute.xlu0 %1372
        %1374 = vset.pattern.permute.xlu0 0
        %1375 = vperm.xlu0 %1374, %v1337
        %v1376 = vpop.permute.xlu0 %1375
        %1377 = vset.pattern.permute.xlu0 0
        %1378 = vperm.xlu0 %1377, %v1338
        %v1379 = vpop.permute.xlu0 %1378
        %1380 = vset.pattern.permute.xlu0 0
        %1381 = vperm.xlu0 %1380, %v1339
        %v1382 = vpop.permute.xlu0 %1381
        %1383 = vset.pattern.permute.xlu0 0
        %1384 = vperm.xlu0 %1383, %v1340
        %v1385 = vpop.permute.xlu0 %1384
        %1386 = vset.pattern.permute.xlu0 0
        %1387 = vperm.xlu0 %1386, %v1341
        %v1388 = vpop.permute.xlu0 %1387
        %1389 = vset.pattern.permute.xlu0 0
        %1390 = vperm.xlu0 %1389, %v1342
        %v1391 = vpop.permute.xlu0 %1390
        %1392 = vset.pattern.permute.xlu0 0
        %1393 = vperm.xlu0 %1392, %v1343
        %v1394 = vpop.permute.xlu0 %1393
        %1395 = vset.pattern.permute.xlu0 0
        %1396 = vperm.xlu0 %1395, %v1344
        %v1397 = vpop.permute.xlu0 %1396
        %1398 = vset.pattern.permute.xlu0 0
        %1399 = vperm.xlu0 %1398, %v1345
        %v1400 = vpop.permute.xlu0 %1399
        %1401 = vset.pattern.permute.xlu0 0
        %1402 = vperm.xlu0 %1401, %v1346
        %v1403 = vpop.permute.xlu0 %1402
        %1404 = vset.pattern.permute.xlu0 0
        %1405 = vperm.xlu0 %1404, %v1347
        %v1406 = vpop.permute.xlu0 %1405
        %1407 = vset.pattern.permute.xlu0 0
        %1408 = vperm.xlu0 %1407, %v1348
        %v1409 = vpop.permute.xlu0 %1408
        %1410 = vset.pattern.permute.xlu0 0
        %1411 = vperm.xlu0 %1410, %v1349
        %v1412 = vpop.permute.xlu0 %1411
        %1413 = vset.pattern.permute.xlu0 0
        %1414 = vperm.xlu0 %1413, %v1350
        %v1415 = vpop.permute.xlu0 %1414
        %1416 = vset.pattern.permute.xlu0 0
        %1417 = vperm.xlu0 %1416, %v1351
        %v1418 = vpop.permute.xlu0 %1417
        %1419 = vset.pattern.permute.xlu0 0
        %1420 = vperm.xlu0 %1419, %v1352
        %v1421 = vpop.permute.xlu0 %1420
        %1422 = vset.pattern.permute.xlu0 0
        %1423 = vperm.xlu0 %1422, %v1353
        %v1424 = vpop.permute.xlu0 %1423
        %1425 = vset.pattern.permute.xlu0 0
        %1426 = vperm.xlu0 %1425, %v1354
        %v1427 = vpop.permute.xlu0 %1426
        %1428 = vset.pattern.permute.xlu0 0
        %1429 = vperm.xlu0 %1428, %v1355
        %v1430 = vpop.permute.xlu0 %1429
        %1431 = vset.pattern.permute.xlu0 0
        %1432 = vperm.xlu0 %1431, %v1356
        %v1433 = vpop.permute.xlu0 %1432
        %1434 = vset.pattern.permute.xlu0 0
        %1435 = vperm.xlu0 %1434, %v1357
        %v1436 = vpop.permute.xlu0 %1435
        %1437 = vset.pattern.permute.xlu0 0
        %1438 = vperm.xlu0 %1437, %v1358
        %v1439 = vpop.permute.xlu0 %1438
        %1440 = vset.pattern.permute.xlu0 0
        %1441 = vperm.xlu0 %1440, %v1359
        %v1442 = vpop.permute.xlu0 %1441
        %1443 = vset.pattern.permute.xlu0 0
        %1444 = vperm.xlu0 %1443, %v1360
        %v1445 = vpop.permute.xlu0 %1444
        %1446 = vset.pattern.permute.xlu0 0
        %1447 = vperm.xlu0 %1446, %v1361
        %v1448 = vpop.permute.xlu0 %1447
        %1449 = vset.pattern.permute.xlu0 0
        %1450 = vperm.xlu0 %1449, %v1362
        %v1451 = vpop.permute.xlu0 %1450
        %1452 = vset.pattern.permute.xlu0 0
        %1453 = vperm.xlu0 %1452, %v1363
        %v1454 = vpop.permute.xlu0 %1453
        %1455 = vset.pattern.permute.xlu0 0
        %1456 = vperm.xlu0 %1455, %v1364
        %v1457 = vpop.permute.xlu0 %1456
        %1458 = vset.pattern.permute.xlu0 0
        %1459 = vperm.xlu0 %1458, %v1365
        %v1460 = vpop.permute.xlu0 %1459
        %1461 = vset.pattern.permute.xlu0 0
        %1462 = vperm.xlu0 %1461, %v1366
        %v1463 = vpop.permute.xlu0 %1462
        %v1464 = vperm.slane %v1367, 0
        %vm1465 = vcmp.eq.s32.totalorder %v1370, %v1464
        %vm1466 = vcmp.eq.s32.totalorder %v1373, %v1464
        %vm1467 = vcmp.eq.s32.totalorder %v1376, %v1464
        %vm1468 = vcmp.eq.s32.totalorder %v1379, %v1464
        %vm1469 = vcmp.eq.s32.totalorder %v1382, %v1464
        %vm1470 = vcmp.eq.s32.totalorder %v1385, %v1464
        %vm1471 = vcmp.eq.s32.totalorder %v1388, %v1464
        %vm1472 = vcmp.eq.s32.totalorder %v1391, %v1464
        %vm1473 = vcmp.eq.s32.totalorder %v1394, %v1464
        %vm1474 = vcmp.eq.s32.totalorder %v1397, %v1464
        %vm1475 = vcmp.eq.s32.totalorder %v1400, %v1464
        %vm1476 = vcmp.eq.s32.totalorder %v1403, %v1464
        %vm1477 = vcmp.eq.s32.totalorder %v1406, %v1464
        %vm1478 = vcmp.eq.s32.totalorder %v1409, %v1464
        %vm1479 = vcmp.eq.s32.totalorder %v1412, %v1464
        %vm1480 = vcmp.eq.s32.totalorder %v1415, %v1464
        %vm1481 = vcmp.eq.s32.totalorder %v1418, %v1464
        %vm1482 = vcmp.eq.s32.totalorder %v1421, %v1464
        %vm1483 = vcmp.eq.s32.totalorder %v1424, %v1464
        %vm1484 = vcmp.eq.s32.totalorder %v1427, %v1464
        %vm1485 = vcmp.eq.s32.totalorder %v1430, %v1464
        %vm1486 = vcmp.eq.s32.totalorder %v1433, %v1464
        %vm1487 = vcmp.eq.s32.totalorder %v1436, %v1464
        %vm1488 = vcmp.eq.s32.totalorder %v1439, %v1464
        %vm1489 = vcmp.eq.s32.totalorder %v1442, %v1464
        %vm1490 = vcmp.eq.s32.totalorder %v1445, %v1464
        %vm1491 = vcmp.eq.s32.totalorder %v1448, %v1464
        %vm1492 = vcmp.eq.s32.totalorder %v1451, %v1464
        %vm1493 = vcmp.eq.s32.totalorder %v1454, %v1464
        %vm1494 = vcmp.eq.s32.totalorder %v1457, %v1464
        %vm1495 = vcmp.eq.s32.totalorder %v1460, %v1464
        %vm1496 = vcmp.eq.s32.totalorder %v1463, %v1464
        %v1497 = vsel %vm1465, 1, 0
        %v1498 = vsel %vm1466, 1, 0
        %v1499 = vsel %vm1467, 1, 0
        %v1500 = vsel %vm1468, 1, 0
        %v1501 = vsel %vm1469, 1, 0
        %v1502 = vsel %vm1470, 1, 0
        %v1503 = vsel %vm1471, 1, 0
        %v1504 = vsel %vm1472, 1, 0
        %v1505 = vsel %vm1473, 1, 0
        %v1506 = vsel %vm1474, 1, 0
        %v1507 = vsel %vm1475, 1, 0
        %v1508 = vsel %vm1476, 1, 0
        %v1509 = vsel %vm1477, 1, 0
        %v1510 = vsel %vm1478, 1, 0
        %v1511 = vsel %vm1479, 1, 0
        %v1512 = vsel %vm1480, 1, 0
        %v1513 = vsel %vm1481, 1, 0
        %v1514 = vsel %vm1482, 1, 0
        %v1515 = vsel %vm1483, 1, 0
        %v1516 = vsel %vm1484, 1, 0
        %v1517 = vsel %vm1485, 1, 0
        %v1518 = vsel %vm1486, 1, 0
        %v1519 = vsel %vm1487, 1, 0
        %v1520 = vsel %vm1488, 1, 0
        %v1521 = vsel %vm1489, 1, 0
        %v1522 = vsel %vm1490, 1, 0
        %v1523 = vsel %vm1491, 1, 0
        %v1524 = vsel %vm1492, 1, 0
        %v1525 = vsel %vm1493, 1, 0
        %v1526 = vsel %vm1494, 1, 0
        %v1527 = vsel %vm1495, 1, 0
        %v1528 = vsel %vm1496, 1, 0
        %v1529 = vcvt.s32.f32 %v1497
        %v1530 = vcvt.s32.f32 %v1498
        %v1531 = vcvt.s32.f32 %v1499
        %v1532 = vcvt.s32.f32 %v1500
        %v1533 = vcvt.s32.f32 %v1501
        %v1534 = vcvt.s32.f32 %v1502
        %v1535 = vcvt.s32.f32 %v1503
        %v1536 = vcvt.s32.f32 %v1504
        %v1537 = vcvt.s32.f32 %v1505
        %v1538 = vcvt.s32.f32 %v1506
        %v1539 = vcvt.s32.f32 %v1507
        %v1540 = vcvt.s32.f32 %v1508
        %v1541 = vcvt.s32.f32 %v1509
        %v1542 = vcvt.s32.f32 %v1510
        %v1543 = vcvt.s32.f32 %v1511
        %v1544 = vcvt.s32.f32 %v1512
        %v1545 = vcvt.s32.f32 %v1513
        %v1546 = vcvt.s32.f32 %v1514
        %v1547 = vcvt.s32.f32 %v1515
        %v1548 = vcvt.s32.f32 %v1516
        %v1549 = vcvt.s32.f32 %v1517
        %v1550 = vcvt.s32.f32 %v1518
        %v1551 = vcvt.s32.f32 %v1519
        %v1552 = vcvt.s32.f32 %v1520
        %v1553 = vcvt.s32.f32 %v1521
        %v1554 = vcvt.s32.f32 %v1522
        %v1555 = vcvt.s32.f32 %v1523
        %v1556 = vcvt.s32.f32 %v1524
        %v1557 = vcvt.s32.f32 %v1525
        %v1558 = vcvt.s32.f32 %v1526
        %v1559 = vcvt.s32.f32 %v1527
        %v1560 = vcvt.s32.f32 %v1528
        %1562 = vset.pattern.permute.xlu0 0
        %1563 = vperm.xlu0 %1562, %v1303
        %v1564 = vpop.permute.xlu0 %1563
        %1567 = vset.pattern.permute.xlu0 0
        %1568 = vperm.xlu0 %1567, %v1304
        %v1569 = vpop.permute.xlu0 %1568
        %1572 = vset.pattern.permute.xlu0 0
        %1573 = vperm.xlu0 %1572, %v1305
        %v1574 = vpop.permute.xlu0 %1573
        %1577 = vset.pattern.permute.xlu0 0
        %1578 = vperm.xlu0 %1577, %v1306
        %v1579 = vpop.permute.xlu0 %1578
        %1582 = vset.pattern.permute.xlu0 0
        %1583 = vperm.xlu0 %1582, %v1307
        %v1584 = vpop.permute.xlu0 %1583
        %1587 = vset.pattern.permute.xlu0 0
        %1588 = vperm.xlu0 %1587, %v1308
        %v1589 = vpop.permute.xlu0 %1588
        %1592 = vset.pattern.permute.xlu0 0
        %1593 = vperm.xlu0 %1592, %v1309
        %v1594 = vpop.permute.xlu0 %1593
        %1597 = vset.pattern.permute.xlu0 0
        %1598 = vperm.xlu0 %1597, %v1310
        %v1599 = vpop.permute.xlu0 %1598
        %1602 = vset.pattern.permute.xlu0 0
        %1603 = vperm.xlu0 %1602, %v1311
        %v1604 = vpop.permute.xlu0 %1603
        %1607 = vset.pattern.permute.xlu0 0
        %1608 = vperm.xlu0 %1607, %v1312
        %v1609 = vpop.permute.xlu0 %1608
        %1612 = vset.pattern.permute.xlu0 0
        %1613 = vperm.xlu0 %1612, %v1313
        %v1614 = vpop.permute.xlu0 %1613
        %1617 = vset.pattern.permute.xlu0 0
        %1618 = vperm.xlu0 %1617, %v1314
        %v1619 = vpop.permute.xlu0 %1618
        %1622 = vset.pattern.permute.xlu0 0
        %1623 = vperm.xlu0 %1622, %v1315
        %v1624 = vpop.permute.xlu0 %1623
        %1627 = vset.pattern.permute.xlu0 0
        %1628 = vperm.xlu0 %1627, %v1316
        %v1629 = vpop.permute.xlu0 %1628
        %1632 = vset.pattern.permute.xlu0 0
        %1633 = vperm.xlu0 %1632, %v1317
        %v1634 = vpop.permute.xlu0 %1633
        %1637 = vset.pattern.permute.xlu0 0
        %1638 = vperm.xlu0 %1637, %v1318
        %v1639 = vpop.permute.xlu0 %1638
        %1642 = vset.pattern.permute.xlu0 0
        %1643 = vperm.xlu0 %1642, %v1319
        %v1644 = vpop.permute.xlu0 %1643
        %1647 = vset.pattern.permute.xlu0 0
        %1648 = vperm.xlu0 %1647, %v1320
        %v1649 = vpop.permute.xlu0 %1648
        %1652 = vset.pattern.permute.xlu0 0
        %1653 = vperm.xlu0 %1652, %v1321
        %v1654 = vpop.permute.xlu0 %1653
        %1657 = vset.pattern.permute.xlu0 0
        %1658 = vperm.xlu0 %1657, %v1322
        %v1659 = vpop.permute.xlu0 %1658
        %1662 = vset.pattern.permute.xlu0 0
        %1663 = vperm.xlu0 %1662, %v1323
        %v1664 = vpop.permute.xlu0 %1663
        %1667 = vset.pattern.permute.xlu0 0
        %1668 = vperm.xlu0 %1667, %v1324
        %v1669 = vpop.permute.xlu0 %1668
        %1672 = vset.pattern.permute.xlu0 0
        %1673 = vperm.xlu0 %1672, %v1325
        %v1674 = vpop.permute.xlu0 %1673
        %1677 = vset.pattern.permute.xlu0 0
        %1678 = vperm.xlu0 %1677, %v1326
        %v1679 = vpop.permute.xlu0 %1678
        %1682 = vset.pattern.permute.xlu0 0
        %1683 = vperm.xlu0 %1682, %v1327
        %v1684 = vpop.permute.xlu0 %1683
        %1687 = vset.pattern.permute.xlu0 0
        %1688 = vperm.xlu0 %1687, %v1328
        %v1689 = vpop.permute.xlu0 %1688
        %1692 = vset.pattern.permute.xlu0 0
        %1693 = vperm.xlu0 %1692, %v1329
        %v1694 = vpop.permute.xlu0 %1693
        %1697 = vset.pattern.permute.xlu0 0
        %1698 = vperm.xlu0 %1697, %v1330
        %v1699 = vpop.permute.xlu0 %1698
        %1702 = vset.pattern.permute.xlu0 0
        %1703 = vperm.xlu0 %1702, %v1331
        %v1704 = vpop.permute.xlu0 %1703
        %1707 = vset.pattern.permute.xlu0 0
        %1708 = vperm.xlu0 %1707, %v1332
        %v1709 = vpop.permute.xlu0 %1708
        %1712 = vset.pattern.permute.xlu0 0
        %1713 = vperm.xlu0 %1712, %v1333
        %v1714 = vpop.permute.xlu0 %1713
        %1717 = vset.pattern.permute.xlu0 0
        %1718 = vperm.xlu0 %1717, %v1334
        %v1719 = vpop.permute.xlu0 %1718
        %v1721 = vmul.f32 %v1529, %v1564
        %v1722 = vmul.f32 %v1530, %v1569
        %v1723 = vmul.f32 %v1531, %v1574
        %v1724 = vmul.f32 %v1532, %v1579
        %v1725 = vmul.f32 %v1533, %v1584
        %v1726 = vmul.f32 %v1534, %v1589
        %v1727 = vmul.f32 %v1535, %v1594
        %v1728 = vmul.f32 %v1536, %v1599
        %v1729 = vmul.f32 %v1537, %v1604
        %v1730 = vmul.f32 %v1538, %v1609
        %v1731 = vmul.f32 %v1539, %v1614
        %v1732 = vmul.f32 %v1540, %v1619
        %v1733 = vmul.f32 %v1541, %v1624
        %v1734 = vmul.f32 %v1542, %v1629
        %v1735 = vmul.f32 %v1543, %v1634
        %v1736 = vmul.f32 %v1544, %v1639
        %v1737 = vmul.f32 %v1545, %v1644
        %v1738 = vmul.f32 %v1546, %v1649
        %v1739 = vmul.f32 %v1547, %v1654
        %v1740 = vmul.f32 %v1548, %v1659
        %v1741 = vmul.f32 %v1549, %v1664
        %v1742 = vmul.f32 %v1550, %v1669
        %v1743 = vmul.f32 %v1551, %v1674
        %v1744 = vmul.f32 %v1552, %v1679
        %v1745 = vmul.f32 %v1553, %v1684
        %v1746 = vmul.f32 %v1554, %v1689
        %v1747 = vmul.f32 %v1555, %v1694
        %v1748 = vmul.f32 %v1556, %v1699
        %v1749 = vmul.f32 %v1557, %v1704
        %v1750 = vmul.f32 %v1558, %v1709
        %v1751 = vmul.f32 %v1559, %v1714
        %v1752 = vmul.f32 %v1560, %v1719
        %v1753 = vsub.f32 %v1564, %v1721
        %v1754 = vsub.f32 %v1569, %v1722
        %v1755 = vsub.f32 %v1574, %v1723
        %v1756 = vsub.f32 %v1579, %v1724
        %v1757 = vsub.f32 %v1584, %v1725
        %v1758 = vsub.f32 %v1589, %v1726
        %v1759 = vsub.f32 %v1594, %v1727
        %v1760 = vsub.f32 %v1599, %v1728
        %v1761 = vsub.f32 %v1604, %v1729
        %v1762 = vsub.f32 %v1609, %v1730
        %v1763 = vsub.f32 %v1614, %v1731
        %v1764 = vsub.f32 %v1619, %v1732
        %v1765 = vsub.f32 %v1624, %v1733
        %v1766 = vsub.f32 %v1629, %v1734
        %v1767 = vsub.f32 %v1634, %v1735
        %v1768 = vsub.f32 %v1639, %v1736
        %v1769 = vsub.f32 %v1644, %v1737
        %v1770 = vsub.f32 %v1649, %v1738
        %v1771 = vsub.f32 %v1654, %v1739
        %v1772 = vsub.f32 %v1659, %v1740
        %v1773 = vsub.f32 %v1664, %v1741
        %v1774 = vsub.f32 %v1669, %v1742
        %v1775 = vsub.f32 %v1674, %v1743
        %v1776 = vsub.f32 %v1679, %v1744
        %v1777 = vsub.f32 %v1684, %v1745
        %v1778 = vsub.f32 %v1689, %v1746
        %v1779 = vsub.f32 %v1694, %v1747
        %v1780 = vsub.f32 %v1699, %v1748
        %v1781 = vsub.f32 %v1704, %v1749
        %v1782 = vsub.f32 %v1709, %v1750
        %v1783 = vsub.f32 %v1714, %v1751
        %v1784 = vsub.f32 %v1719, %v1752
        %v1785 = vmul.f32 %v930, %v1721
        %v1786 = vmul.f32 %v942, %v1722
        %v1787 = vmul.f32 %v954, %v1723
        %v1788 = vmul.f32 %v966, %v1724
        %v1789 = vmul.f32 %v978, %v1725
        %v1790 = vmul.f32 %v990, %v1726
        %v1791 = vmul.f32 %v1002, %v1727
        %v1792 = vmul.f32 %v1014, %v1728
        %v1793 = vmul.f32 %v1026, %v1729
        %v1794 = vmul.f32 %v1038, %v1730
        %v1795 = vmul.f32 %v1050, %v1731
        %v1796 = vmul.f32 %v1062, %v1732
        %v1797 = vmul.f32 %v1074, %v1733
        %v1798 = vmul.f32 %v1086, %v1734
        %v1799 = vmul.f32 %v1098, %v1735
        %v1800 = vmul.f32 %v1110, %v1736
        %v1801 = vmul.f32 %v1122, %v1737
        %v1802 = vmul.f32 %v1134, %v1738
        %v1803 = vmul.f32 %v1146, %v1739
        %v1804 = vmul.f32 %v1158, %v1740
        %v1805 = vmul.f32 %v1170, %v1741
        %v1806 = vmul.f32 %v1182, %v1742
        %v1807 = vmul.f32 %v1194, %v1743
        %v1808 = vmul.f32 %v1206, %v1744
        %v1809 = vmul.f32 %v1218, %v1745
        %v1810 = vmul.f32 %v1230, %v1746
        %v1811 = vmul.f32 %v1242, %v1747
        %v1812 = vmul.f32 %v1254, %v1748
        %v1813 = vmul.f32 %v1266, %v1749
        %v1814 = vmul.f32 %v1278, %v1750
        %v1815 = vmul.f32 %v1290, %v1751
        %v1816 = vmul.f32 %v1302, %v1752
        %v1817 = vmax.f32 %v1785, %v1789
        %v1818 = vmax.f32 %v1786, %v1790
        %v1819 = vmax.f32 %v1787, %v1791
        %v1820 = vmax.f32 %v1788, %v1792
        %v1821 = vmax.f32 %v1817, %v1793
        %v1822 = vmax.f32 %v1818, %v1794
        %v1823 = vmax.f32 %v1819, %v1795
        %v1824 = vmax.f32 %v1820, %v1796
        %v1825 = vmax.f32 %v1821, %v1797
        %v1826 = vmax.f32 %v1822, %v1798
        %v1827 = vmax.f32 %v1823, %v1799
        %v1828 = vmax.f32 %v1824, %v1800
        %v1829 = vmax.f32 %v1825, %v1801
        %v1830 = vmax.f32 %v1826, %v1802
        %v1831 = vmax.f32 %v1827, %v1803
        %v1832 = vmax.f32 %v1828, %v1804
        %v1833 = vmax.f32 %v1829, %v1805
        %v1834 = vmax.f32 %v1830, %v1806
        %v1835 = vmax.f32 %v1831, %v1807
        %v1836 = vmax.f32 %v1832, %v1808
        %v1837 = vmax.f32 %v1833, %v1809
        %v1838 = vmax.f32 %v1834, %v1810
        %v1839 = vmax.f32 %v1835, %v1811
        %v1840 = vmax.f32 %v1836, %v1812
        %v1841 = vmax.f32 %v1837, %v1813
        %v1842 = vmax.f32 %v1838, %v1814
        %v1843 = vmax.f32 %v1839, %v1815
        %v1844 = vmax.f32 %v1840, %v1816
        %v1845 = vmax.f32 %v1841, %v1842
        %v1846 = vmax.f32 %v1843, %v1844
        %v1847 = vmax.f32 %v1845, %v1846
        %v1848 = vrot.slane %v1847, 4
        %v1849 = vmax.f32 %v1847, %v1848
        %v1850 = vrot.slane %v1849, 2
        %v1851 = vmax.f32 %v1849, %v1850
        %v1852 = vrot.slane %v1851, 1
        %v1853 = vmax.f32 %v1851, %v1852
        %v1854 = vsub.f32 %v1785, %v1853
        %v1855 = vsub.f32 %v1786, %v1853
        %v1856 = vsub.f32 %v1787, %v1853
        %v1857 = vsub.f32 %v1788, %v1853
        %v1858 = vsub.f32 %v1789, %v1853
        %v1859 = vsub.f32 %v1790, %v1853
        %v1860 = vsub.f32 %v1791, %v1853
        %v1861 = vsub.f32 %v1792, %v1853
        %v1862 = vsub.f32 %v1793, %v1853
        %v1863 = vsub.f32 %v1794, %v1853
        %v1864 = vsub.f32 %v1795, %v1853
        %v1865 = vsub.f32 %v1796, %v1853
        %v1866 = vsub.f32 %v1797, %v1853
        %v1867 = vsub.f32 %v1798, %v1853
        %v1868 = vsub.f32 %v1799, %v1853
        %v1869 = vsub.f32 %v1800, %v1853
        %v1870 = vsub.f32 %v1801, %v1853
        %v1871 = vsub.f32 %v1802, %v1853
        %v1872 = vsub.f32 %v1803, %v1853
        %v1873 = vsub.f32 %v1804, %v1853
        %v1874 = vsub.f32 %v1805, %v1853
        %v1875 = vsub.f32 %v1806, %v1853
        %v1876 = vsub.f32 %v1807, %v1853
        %v1877 = vsub.f32 %v1808, %v1853
        %v1878 = vsub.f32 %v1809, %v1853
        %v1879 = vsub.f32 %v1810, %v1853
        %v1880 = vsub.f32 %v1811, %v1853
        %v1881 = vsub.f32 %v1812, %v1853
        %v1882 = vsub.f32 %v1813, %v1853
        %v1883 = vsub.f32 %v1814, %v1853
        %v1884 = vsub.f32 %v1815, %v1853
        %v1885 = vsub.f32 %v1816, %v1853
        %v1886 = vmul.f32 %v1854, 1.442695
        %v1887 = vpow.pop %v1886
        %v1888 = vmul.f32 %v1855, 1.442695
        %v1889 = vpow.pop %v1888
        %v1890 = vmul.f32 %v1856, 1.442695
        %v1891 = vpow.pop %v1890
        %v1892 = vmul.f32 %v1857, 1.442695
        %v1893 = vpow.pop %v1892
        %v1894 = vmul.f32 %v1858, 1.442695
        %v1895 = vpow.pop %v1894
        %v1896 = vmul.f32 %v1859, 1.442695
        %v1897 = vpow.pop %v1896
        %v1898 = vmul.f32 %v1860, 1.442695
        %v1899 = vpow.pop %v1898
        %v1900 = vmul.f32 %v1861, 1.442695
        %v1901 = vpow.pop %v1900
        %v1902 = vmul.f32 %v1862, 1.442695
        %v1903 = vpow.pop %v1902
        %v1904 = vmul.f32 %v1863, 1.442695
        %v1905 = vpow.pop %v1904
        %v1906 = vmul.f32 %v1864, 1.442695
        %v1907 = vpow.pop %v1906
        %v1908 = vmul.f32 %v1865, 1.442695
        %v1909 = vpow.pop %v1908
        %v1910 = vmul.f32 %v1866, 1.442695
        %v1911 = vpow.pop %v1910
        %v1912 = vmul.f32 %v1867, 1.442695
        %v1913 = vpow.pop %v1912
        %v1914 = vmul.f32 %v1868, 1.442695
        %v1915 = vpow.pop %v1914
        %v1916 = vmul.f32 %v1869, 1.442695
        %v1917 = vpow.pop %v1916
        %v1918 = vmul.f32 %v1870, 1.442695
        %v1919 = vpow.pop %v1918
        %v1920 = vmul.f32 %v1871, 1.442695
        %v1921 = vpow.pop %v1920
        %v1922 = vmul.f32 %v1872, 1.442695
        %v1923 = vpow.pop %v1922
        %v1924 = vmul.f32 %v1873, 1.442695
        %v1925 = vpow.pop %v1924
        %v1926 = vmul.f32 %v1874, 1.442695
        %v1927 = vpow.pop %v1926
        %v1928 = vmul.f32 %v1875, 1.442695
        %v1929 = vpow.pop %v1928
        %v1930 = vmul.f32 %v1876, 1.442695
        %v1931 = vpow.pop %v1930
        %v1932 = vmul.f32 %v1877, 1.442695
        %v1933 = vpow.pop %v1932
        %v1934 = vmul.f32 %v1878, 1.442695
        %v1935 = vpow.pop %v1934
        %v1936 = vmul.f32 %v1879, 1.442695
        %v1937 = vpow.pop %v1936
        %v1938 = vmul.f32 %v1880, 1.442695
        %v1939 = vpow.pop %v1938
        %v1940 = vmul.f32 %v1881, 1.442695
        %v1941 = vpow.pop %v1940
        %v1942 = vmul.f32 %v1882, 1.442695
        %v1943 = vpow.pop %v1942
        %v1944 = vmul.f32 %v1883, 1.442695
        %v1945 = vpow.pop %v1944
        %v1946 = vmul.f32 %v1884, 1.442695
        %v1947 = vpow.pop %v1946
        %v1948 = vmul.f32 %v1885, 1.442695
        %v1949 = vpow.pop %v1948
        %v1950 = vmul.f32 %v1887, %v1721
        %v1951 = vmul.f32 %v1889, %v1722
        %v1952 = vmul.f32 %v1891, %v1723
        %v1953 = vmul.f32 %v1893, %v1724
        %v1954 = vmul.f32 %v1895, %v1725
        %v1955 = vmul.f32 %v1897, %v1726
        %v1956 = vmul.f32 %v1899, %v1727
        %v1957 = vmul.f32 %v1901, %v1728
        %v1958 = vmul.f32 %v1903, %v1729
        %v1959 = vmul.f32 %v1905, %v1730
        %v1960 = vmul.f32 %v1907, %v1731
        %v1961 = vmul.f32 %v1909, %v1732
        %v1962 = vmul.f32 %v1911, %v1733
        %v1963 = vmul.f32 %v1913, %v1734
        %v1964 = vmul.f32 %v1915, %v1735
        %v1965 = vmul.f32 %v1917, %v1736
        %v1966 = vmul.f32 %v1919, %v1737
        %v1967 = vmul.f32 %v1921, %v1738
        %v1968 = vmul.f32 %v1923, %v1739
        %v1969 = vmul.f32 %v1925, %v1740
        %v1970 = vmul.f32 %v1927, %v1741
        %v1971 = vmul.f32 %v1929, %v1742
        %v1972 = vmul.f32 %v1931, %v1743
        %v1973 = vmul.f32 %v1933, %v1744
        %v1974 = vmul.f32 %v1935, %v1745
        %v1975 = vmul.f32 %v1937, %v1746
        %v1976 = vmul.f32 %v1939, %v1747
        %v1977 = vmul.f32 %v1941, %v1748
        %v1978 = vmul.f32 %v1943, %v1749
        %v1979 = vmul.f32 %v1945, %v1750
        %v1980 = vmul.f32 %v1947, %v1751
        %v1981 = vmul.f32 %v1949, %v1752
        %v1982 = vmul.f32 %v930, %v1950
        %v1983 = vmul.f32 %v942, %v1951
        %v1984 = vmul.f32 %v954, %v1952
        %v1985 = vmul.f32 %v966, %v1953
        %v1986 = vmul.f32 %v978, %v1954
        %v1987 = vmul.f32 %v990, %v1955
        %v1988 = vmul.f32 %v1002, %v1956
        %v1989 = vmul.f32 %v1014, %v1957
        %v1990 = vmul.f32 %v1026, %v1958
        %v1991 = vmul.f32 %v1038, %v1959
        %v1992 = vmul.f32 %v1050, %v1960
        %v1993 = vmul.f32 %v1062, %v1961
        %v1994 = vmul.f32 %v1074, %v1962
        %v1995 = vmul.f32 %v1086, %v1963
        %v1996 = vmul.f32 %v1098, %v1964
        %v1997 = vmul.f32 %v1110, %v1965
        %v1998 = vmul.f32 %v1122, %v1966
        %v1999 = vmul.f32 %v1134, %v1967
        %v2000 = vmul.f32 %v1146, %v1968
        %v2001 = vmul.f32 %v1158, %v1969
        %v2002 = vmul.f32 %v1170, %v1970
        %v2003 = vmul.f32 %v1182, %v1971
        %v2004 = vmul.f32 %v1194, %v1972
        %v2005 = vmul.f32 %v1206, %v1973
        %v2006 = vmul.f32 %v1218, %v1974
        %v2007 = vmul.f32 %v1230, %v1975
        %v2008 = vmul.f32 %v1242, %v1976
        %v2009 = vmul.f32 %v1254, %v1977
        %v2010 = vmul.f32 %v1266, %v1978
        %v2011 = vmul.f32 %v1278, %v1979
        %v2012 = vmul.f32 %v1290, %v1980
        %v2013 = vmul.f32 %v1302, %v1981
        %v2014 = vadd.f32 %v1982, %v1983
        %v2015 = vadd.f32 %v2014, %v1984
        %v2016 = vadd.f32 %v2015, %v1985
        %v2017 = vadd.f32 %v2016, %v1986
        %v2018 = vadd.f32 %v2017, %v1987
        %v2019 = vadd.f32 %v2018, %v1988
        %v2020 = vadd.f32 %v2019, %v1989
        %v2021 = vadd.f32 %v2020, %v1990
        %v2022 = vadd.f32 %v2021, %v1991
        %v2023 = vadd.f32 %v2022, %v1992
        %v2024 = vadd.f32 %v2023, %v1993
        %v2025 = vadd.f32 %v2024, %v1994
        %v2026 = vadd.f32 %v2025, %v1995
        %v2027 = vadd.f32 %v2026, %v1996
        %v2028 = vadd.f32 %v2027, %v1997
        %v2029 = vadd.f32 %v2028, %v1998
        %v2030 = vadd.f32 %v2029, %v1999
        %v2031 = vadd.f32 %v2030, %v2000
        %v2032 = vadd.f32 %v2031, %v2001
        %v2033 = vadd.f32 %v2032, %v2002
        %v2034 = vadd.f32 %v2033, %v2003
        %v2035 = vadd.f32 %v2034, %v2004
        %v2036 = vadd.f32 %v2035, %v2005
        %v2037 = vadd.f32 %v2036, %v2006
        %v2038 = vadd.f32 %v2037, %v2007
        %v2039 = vadd.f32 %v2038, %v2008
        %v2040 = vadd.f32 %v2039, %v2009
        %v2041 = vadd.f32 %v2040, %v2010
        %v2042 = vadd.f32 %v2041, %v2011
        %v2043 = vadd.f32 %v2042, %v2012
        %v2044 = vadd.f32 %v2043, %v2013
        %v2045 = vrot.slane %v2044, 4
        %v2046 = vadd.f32 %v2044, %v2045
        %v2047 = vrot.slane %v2046, 2
        %v2048 = vadd.f32 %v2046, %v2047
        %v2049 = vrot.slane %v2048, 1
        %v2050 = vadd.f32 %v2048, %v2049
        %v2051 = vadd.f32 %v1950, %v1951
        %v2052 = vadd.f32 %v2051, %v1952
        %v2053 = vadd.f32 %v2052, %v1953
        %v2054 = vadd.f32 %v2053, %v1954
        %v2055 = vadd.f32 %v2054, %v1955
        %v2056 = vadd.f32 %v2055, %v1956
        %v2057 = vadd.f32 %v2056, %v1957
        %v2058 = vadd.f32 %v2057, %v1958
        %v2059 = vadd.f32 %v2058, %v1959
        %v2060 = vadd.f32 %v2059, %v1960
        %v2061 = vadd.f32 %v2060, %v1961
        %v2062 = vadd.f32 %v2061, %v1962
        %v2063 = vadd.f32 %v2062, %v1963
        %v2064 = vadd.f32 %v2063, %v1964
        %v2065 = vadd.f32 %v2064, %v1965
        %v2066 = vadd.f32 %v2065, %v1966
        %v2067 = vadd.f32 %v2066, %v1967
        %v2068 = vadd.f32 %v2067, %v1968
        %v2069 = vadd.f32 %v2068, %v1969
        %v2070 = vadd.f32 %v2069, %v1970
        %v2071 = vadd.f32 %v2070, %v1971
        %v2072 = vadd.f32 %v2071, %v1972
        %v2073 = vadd.f32 %v2072, %v1973
        %v2074 = vadd.f32 %v2073, %v1974
        %v2075 = vadd.f32 %v2074, %v1975
        %v2076 = vadd.f32 %v2075, %v1976
        %v2077 = vadd.f32 %v2076, %v1977
        %v2078 = vadd.f32 %v2077, %v1978
        %v2079 = vadd.f32 %v2078, %v1979
        %v2080 = vadd.f32 %v2079, %v1980
        %v2081 = vadd.f32 %v2080, %v1981
        %v2082 = vrot.slane %v2081, 4
        %v2083 = vadd.f32 %v2081, %v2082
        %v2084 = vrot.slane %v2083, 2
        %v2085 = vadd.f32 %v2083, %v2084
        %v2086 = vrot.slane %v2085, 1
        %v2087 = vadd.f32 %v2085, %v2086
        %v2088 = vadd.f32 %v2087, 1e-06
        %v2089 = vrcp.pop %v2088
        %v2090 = vmul.f32 %v2050, %v2089
        %v2091 = vsub.f32 0.0, %v930
        %v2092 = vsub.f32 0.0, %v942
        %v2093 = vsub.f32 0.0, %v954
        %v2094 = vsub.f32 0.0, %v966
        %v2095 = vsub.f32 0.0, %v978
        %v2096 = vsub.f32 0.0, %v990
        %v2097 = vsub.f32 0.0, %v1002
        %v2098 = vsub.f32 0.0, %v1014
        %v2099 = vsub.f32 0.0, %v1026
        %v2100 = vsub.f32 0.0, %v1038
        %v2101 = vsub.f32 0.0, %v1050
        %v2102 = vsub.f32 0.0, %v1062
        %v2103 = vsub.f32 0.0, %v1074
        %v2104 = vsub.f32 0.0, %v1086
        %v2105 = vsub.f32 0.0, %v1098
        %v2106 = vsub.f32 0.0, %v1110
        %v2107 = vsub.f32 0.0, %v1122
        %v2108 = vsub.f32 0.0, %v1134
        %v2109 = vsub.f32 0.0, %v1146
        %v2110 = vsub.f32 0.0, %v1158
        %v2111 = vsub.f32 0.0, %v1170
        %v2112 = vsub.f32 0.0, %v1182
        %v2113 = vsub.f32 0.0, %v1194
        %v2114 = vsub.f32 0.0, %v1206
        %v2115 = vsub.f32 0.0, %v1218
        %v2116 = vsub.f32 0.0, %v1230
        %v2117 = vsub.f32 0.0, %v1242
        %v2118 = vsub.f32 0.0, %v1254
        %v2119 = vsub.f32 0.0, %v1266
        %v2120 = vsub.f32 0.0, %v1278
        %v2121 = vsub.f32 0.0, %v1290
        %v2122 = vsub.f32 0.0, %v1302
        %v2123 = vmul.f32 %v2091, 1.442695
        %v2124 = vpow.pop %v2123
        %v2125 = vmul.f32 %v2092, 1.442695
        %v2126 = vpow.pop %v2125
        %v2127 = vmul.f32 %v2093, 1.442695
        %v2128 = vpow.pop %v2127
        %v2129 = vmul.f32 %v2094, 1.442695
        %v2130 = vpow.pop %v2129
        %v2131 = vmul.f32 %v2095, 1.442695
        %v2132 = vpow.pop %v2131
        %v2133 = vmul.f32 %v2096, 1.442695
        %v2134 = vpow.pop %v2133
        %v2135 = vmul.f32 %v2097, 1.442695
        %v2136 = vpow.pop %v2135
        %v2137 = vmul.f32 %v2098, 1.442695
        %v2138 = vpow.pop %v2137
        %v2139 = vmul.f32 %v2099, 1.442695
        %v2140 = vpow.pop %v2139
        %v2141 = vmul.f32 %v2100, 1.442695
        %v2142 = vpow.pop %v2141
        %v2143 = vmul.f32 %v2101, 1.442695
        %v2144 = vpow.pop %v2143
        %v2145 = vmul.f32 %v2102, 1.442695
        %v2146 = vpow.pop %v2145
        %v2147 = vmul.f32 %v2103, 1.442695
        %v2148 = vpow.pop %v2147
        %v2149 = vmul.f32 %v2104, 1.442695
        %v2150 = vpow.pop %v2149
        %v2151 = vmul.f32 %v2105, 1.442695
        %v2152 = vpow.pop %v2151
        %v2153 = vmul.f32 %v2106, 1.442695
        %v2154 = vpow.pop %v2153
        %v2155 = vmul.f32 %v2107, 1.442695
        %v2156 = vpow.pop %v2155
        %v2157 = vmul.f32 %v2108, 1.442695
        %v2158 = vpow.pop %v2157
        %v2159 = vmul.f32 %v2109, 1.442695
        %v2160 = vpow.pop %v2159
        %v2161 = vmul.f32 %v2110, 1.442695
        %v2162 = vpow.pop %v2161
        %v2163 = vmul.f32 %v2111, 1.442695
        %v2164 = vpow.pop %v2163
        %v2165 = vmul.f32 %v2112, 1.442695
        %v2166 = vpow.pop %v2165
        %v2167 = vmul.f32 %v2113, 1.442695
        %v2168 = vpow.pop %v2167
        %v2169 = vmul.f32 %v2114, 1.442695
        %v2170 = vpow.pop %v2169
        %v2171 = vmul.f32 %v2115, 1.442695
        %v2172 = vpow.pop %v2171
        %v2173 = vmul.f32 %v2116, 1.442695
        %v2174 = vpow.pop %v2173
        %v2175 = vmul.f32 %v2117, 1.442695
        %v2176 = vpow.pop %v2175
        %v2177 = vmul.f32 %v2118, 1.442695
        %v2178 = vpow.pop %v2177
        %v2179 = vmul.f32 %v2119, 1.442695
        %v2180 = vpow.pop %v2179
        %v2181 = vmul.f32 %v2120, 1.442695
        %v2182 = vpow.pop %v2181
        %v2183 = vmul.f32 %v2121, 1.442695
        %v2184 = vpow.pop %v2183
        %v2185 = vmul.f32 %v2122, 1.442695
        %v2186 = vpow.pop %v2185
        %v2187 = vmul.f32 %v2124, %v1753
        %v2188 = vmul.f32 %v2126, %v1754
        %v2189 = vmul.f32 %v2128, %v1755
        %v2190 = vmul.f32 %v2130, %v1756
        %v2191 = vmul.f32 %v2132, %v1757
        %v2192 = vmul.f32 %v2134, %v1758
        %v2193 = vmul.f32 %v2136, %v1759
        %v2194 = vmul.f32 %v2138, %v1760
        %v2195 = vmul.f32 %v2140, %v1761
        %v2196 = vmul.f32 %v2142, %v1762
        %v2197 = vmul.f32 %v2144, %v1763
        %v2198 = vmul.f32 %v2146, %v1764
        %v2199 = vmul.f32 %v2148, %v1765
        %v2200 = vmul.f32 %v2150, %v1766
        %v2201 = vmul.f32 %v2152, %v1767
        %v2202 = vmul.f32 %v2154, %v1768
        %v2203 = vmul.f32 %v2156, %v1769
        %v2204 = vmul.f32 %v2158, %v1770
        %v2205 = vmul.f32 %v2160, %v1771
        %v2206 = vmul.f32 %v2162, %v1772
        %v2207 = vmul.f32 %v2164, %v1773
        %v2208 = vmul.f32 %v2166, %v1774
        %v2209 = vmul.f32 %v2168, %v1775
        %v2210 = vmul.f32 %v2170, %v1776
        %v2211 = vmul.f32 %v2172, %v1777
        %v2212 = vmul.f32 %v2174, %v1778
        %v2213 = vmul.f32 %v2176, %v1779
        %v2214 = vmul.f32 %v2178, %v1780
        %v2215 = vmul.f32 %v2180, %v1781
        %v2216 = vmul.f32 %v2182, %v1782
        %v2217 = vmul.f32 %v2184, %v1783
        %v2218 = vmul.f32 %v2186, %v1784
        %v2219 = vmul.f32 %v930, %v2187
        %v2220 = vmul.f32 %v942, %v2188
        %v2221 = vmul.f32 %v954, %v2189
        %v2222 = vmul.f32 %v966, %v2190
        %v2223 = vmul.f32 %v978, %v2191
        %v2224 = vmul.f32 %v990, %v2192
        %v2225 = vmul.f32 %v1002, %v2193
        %v2226 = vmul.f32 %v1014, %v2194
        %v2227 = vmul.f32 %v1026, %v2195
        %v2228 = vmul.f32 %v1038, %v2196
        %v2229 = vmul.f32 %v1050, %v2197
        %v2230 = vmul.f32 %v1062, %v2198
        %v2231 = vmul.f32 %v1074, %v2199
        %v2232 = vmul.f32 %v1086, %v2200
        %v2233 = vmul.f32 %v1098, %v2201
        %v2234 = vmul.f32 %v1110, %v2202
        %v2235 = vmul.f32 %v1122, %v2203
        %v2236 = vmul.f32 %v1134, %v2204
        %v2237 = vmul.f32 %v1146, %v2205
        %v2238 = vmul.f32 %v1158, %v2206
        %v2239 = vmul.f32 %v1170, %v2207
        %v2240 = vmul.f32 %v1182, %v2208
        %v2241 = vmul.f32 %v1194, %v2209
        %v2242 = vmul.f32 %v1206, %v2210
        %v2243 = vmul.f32 %v1218, %v2211
        %v2244 = vmul.f32 %v1230, %v2212
        %v2245 = vmul.f32 %v1242, %v2213
        %v2246 = vmul.f32 %v1254, %v2214
        %v2247 = vmul.f32 %v1266, %v2215
        %v2248 = vmul.f32 %v1278, %v2216
        %v2249 = vmul.f32 %v1290, %v2217
        %v2250 = vmul.f32 %v1302, %v2218
        %v2251 = vadd.f32 %v2219, %v2220
        %v2252 = vadd.f32 %v2251, %v2221
        %v2253 = vadd.f32 %v2252, %v2222
        %v2254 = vadd.f32 %v2253, %v2223
        %v2255 = vadd.f32 %v2254, %v2224
        %v2256 = vadd.f32 %v2255, %v2225
        %v2257 = vadd.f32 %v2256, %v2226
        %v2258 = vadd.f32 %v2257, %v2227
        %v2259 = vadd.f32 %v2258, %v2228
        %v2260 = vadd.f32 %v2259, %v2229
        %v2261 = vadd.f32 %v2260, %v2230
        %v2262 = vadd.f32 %v2261, %v2231
        %v2263 = vadd.f32 %v2262, %v2232
        %v2264 = vadd.f32 %v2263, %v2233
        %v2265 = vadd.f32 %v2264, %v2234
        %v2266 = vadd.f32 %v2265, %v2235
        %v2267 = vadd.f32 %v2266, %v2236
        %v2268 = vadd.f32 %v2267, %v2237
        %v2269 = vadd.f32 %v2268, %v2238
        %v2270 = vadd.f32 %v2269, %v2239
        %v2271 = vadd.f32 %v2270, %v2240
        %v2272 = vadd.f32 %v2271, %v2241
        %v2273 = vadd.f32 %v2272, %v2242
        %v2274 = vadd.f32 %v2273, %v2243
        %v2275 = vadd.f32 %v2274, %v2244
        %v2276 = vadd.f32 %v2275, %v2245
        %v2277 = vadd.f32 %v2276, %v2246
        %v2278 = vadd.f32 %v2277, %v2247
        %v2279 = vadd.f32 %v2278, %v2248
        %v2280 = vadd.f32 %v2279, %v2249
        %v2281 = vadd.f32 %v2280, %v2250
        %v2282 = vrot.slane %v2281, 4
        %v2283 = vadd.f32 %v2281, %v2282
        %v2284 = vrot.slane %v2283, 2
        %v2285 = vadd.f32 %v2283, %v2284
        %v2286 = vrot.slane %v2285, 1
        %v2287 = vadd.f32 %v2285, %v2286
        %v2288 = vadd.f32 %v2187, %v2188
        %v2289 = vadd.f32 %v2288, %v2189
        %v2290 = vadd.f32 %v2289, %v2190
        %v2291 = vadd.f32 %v2290, %v2191
        %v2292 = vadd.f32 %v2291, %v2192
        %v2293 = vadd.f32 %v2292, %v2193
        %v2294 = vadd.f32 %v2293, %v2194
        %v2295 = vadd.f32 %v2294, %v2195
        %v2296 = vadd.f32 %v2295, %v2196
        %v2297 = vadd.f32 %v2296, %v2197
        %v2298 = vadd.f32 %v2297, %v2198
        %v2299 = vadd.f32 %v2298, %v2199
        %v2300 = vadd.f32 %v2299, %v2200
        %v2301 = vadd.f32 %v2300, %v2201
        %v2302 = vadd.f32 %v2301, %v2202
        %v2303 = vadd.f32 %v2302, %v2203
        %v2304 = vadd.f32 %v2303, %v2204
        %v2305 = vadd.f32 %v2304, %v2205
        %v2306 = vadd.f32 %v2305, %v2206
        %v2307 = vadd.f32 %v2306, %v2207
        %v2308 = vadd.f32 %v2307, %v2208
        %v2309 = vadd.f32 %v2308, %v2209
        %v2310 = vadd.f32 %v2309, %v2210
        %v2311 = vadd.f32 %v2310, %v2211
        %v2312 = vadd.f32 %v2311, %v2212
        %v2313 = vadd.f32 %v2312, %v2213
        %v2314 = vadd.f32 %v2313, %v2214
        %v2315 = vadd.f32 %v2314, %v2215
        %v2316 = vadd.f32 %v2315, %v2216
        %v2317 = vadd.f32 %v2316, %v2217
        %v2318 = vadd.f32 %v2317, %v2218
        %v2319 = vrot.slane %v2318, 4
        %v2320 = vadd.f32 %v2318, %v2319
        %v2321 = vrot.slane %v2320, 2
        %v2322 = vadd.f32 %v2320, %v2321
        %v2323 = vrot.slane %v2322, 1
        %v2324 = vadd.f32 %v2322, %v2323
        %v2325 = vadd.f32 %v2324, 1e-06
        %v2326 = vrcp.pop %v2325
        %v2327 = vmul.f32 %v2287, %v2326
        %v2328 = vsub.f32 %v2327, %v2090
        %v2329 = vsub.f32 0.0, %v2328
        %v2330 = vmax.f32 %v2329, 0.0
        %v2331 = vand.u32 2147483647, %v2328
        %v2332 = vsub.f32 0.0, %v2331
        %v2333 = vmul.f32 %v2332, 1.442695
        %v2334 = vpow.pop %v2333
        %v2335 = vadd.f32 %v2334, 1.0
        %v2336 = vlog2.pop %v2335
        %v2337 = vmul.f32 %v2336, 0.6931472
        %v2338 = vmul.f32 -0.5, %v2334
        %v2339 = vadd.f32 %v2338, 1.0
        %v2340 = vmul.f32 %v2339, %v2334
        %v2341 = vand.u32 2147483647, %v2334
        %vm2342 = vcmp.lt.f32.partialorder %v2341, 0.0004427343
        %v2343 = vsel %vm2342, %v2340, %v2337
        %v2344 = vadd.f32 %v2330, %v2343
        %2345 = vst [vmem:[%s430] sm:$0x1] %v2344
        %vm2346 = vcmp.ge.f32.partialorder %v2327, %v2090
        %v2347 = vsel %vm2346, 1, 0
        %v2348 = vcvt.s32.f32 %v2347
        %2349 = vst [vmem:[%s433] sm:$0x1] %v2348
        %p2350 = scmp.lt.s32.totalorder %s20, 1
        %s2351 = scalar_select %p2350, %s20, 1
        %s2352 = scalar_lea.vmem %s7, %s2351
        %p2353 = scmp.lt.s32.totalorder %s20, 1
        %s2354 = scalar_select %p2353, %s20, 1
        %s2355 = scalar_lea.vmem %s8, %s2354
        // Predicated region
        $region87: #{triplet_loss_adp.1} parent=81 // pred_check
          %p2356 = pneg %p200
        $region88: #{triplet_loss_adp.1} parent=81 // pred_check_branch
          %2358 = sbr.rel (%p2356) target = $region90
        $region89: #{triplet_loss_adp.1} parent=81 // pred_region
          _
        $region90: #{triplet_loss_adp.1} parent=81 // pred_fallthru
          _
        // Predicated region
        $region91: #{triplet_loss_adp.1} parent=81 // pred_check
          %p2359 = pneg %p226
        $region92: #{triplet_loss_adp.1} parent=81 // pred_check_branch
          %2361 = sbr.rel (%p2359) target = $region94
        $region93: #{triplet_loss_adp.1} parent=81 // pred_region
          _
        $region94: #{triplet_loss_adp.1} parent=81 // pred_fallthru
          _
      $region82: #{triplet_loss_adp.1} parent=5 // pred_fallthru
        _
      %p2362 = scmp.le.s32.totalorder 2, %s15
      // Predicated region
      $region95: #{triplet_loss_adp.1} parent=5 // pred_check
        %p2363 = pneg %p2362
      $region96: #{triplet_loss_adp.1} parent=5 // pred_check_branch
        %2365 = sbr.rel (%p2363) target = $region98
      $region97: #{triplet_loss_adp.1} parent=5 // pred_region
        %s2366 = ssub.s32 %s15, 2
        // Predicated region
        $region99: #{triplet_loss_adp.1} parent=97 // pred_check
          %p2367 = pneg %p206
        $region100: #{triplet_loss_adp.1} parent=97 // pred_check_branch
          %2369 = sbr.rel (%p2367) target = $region102
        $region101: #{triplet_loss_adp.1} parent=97 // pred_region
          %p2370 = scmp.lt.s32.totalorder %s21, 1
          %s2371 = scalar_select %p2370, %s21, 1
          %s2372 = scalar_lea.vmem %s7, %s2371
        $region102: #{triplet_loss_adp.1} parent=97 // pred_fallthru
          _
        // Predicated region
        $region103: #{triplet_loss_adp.1} parent=97 // pred_check
          %p2373 = pneg %p232
        $region104: #{triplet_loss_adp.1} parent=97 // pred_check_branch
          %2375 = sbr.rel (%p2373) target = $region106
        $region105: #{triplet_loss_adp.1} parent=97 // pred_region
          %p2376 = scmp.lt.s32.totalorder %s21, 1
          %s2377 = scalar_select %p2376, %s21, 1
          %s2378 = scalar_lea.vmem %s8, %s2377
        $region106: #{triplet_loss_adp.1} parent=97 // pred_fallthru
          _
      $region98: #{triplet_loss_adp.1} parent=5 // pred_fallthru
        _
    $region6: #{triplet_loss_adp.1} parent=1 // loop_footer
      %s19 = sadd.s32 1, %s15
    $region7: #{triplet_loss_adp.1} parent=1 // loop_footer_branch
      %14 = sbr.rel target = $region3
    $region8: #{triplet_loss_adp.1} parent=1 // loop_exit
      _

</llo_original>
